<compile_context>
chip_gen: v7x
topology: tpu7x:2x2x1
jax: 0.10.0
libtpu: 0.0.40
codegen_flags: <defaults>
</compile_context>

<pallas_src>
import jax
import jax.numpy as jnp
from jax import lax
from jax.experimental import pallas as pl
from jax.experimental.pallas import tpu as pltpu

EPS = 1e-5

_VMEM = pl.BlockSpec(memory_space=pltpu.MemorySpace.VMEM)


# ----------------------------- Pallas kernels ------------------------------ #

def _matmul_bias_kernel(x_ref, w_ref, b_ref, o_ref):
    # o = x @ w + b  (single block, everything VMEM-resident, no accumulator)
    o_ref[...] = (
        jnp.dot(x_ref[...], w_ref[...], preferred_element_type=jnp.float32)
        + b_ref[...]
    ).astype(o_ref.dtype)


def _matmul_bias_bn_relu_kernel(x_ref, w_ref, b_ref, o_ref):
    # o = relu(batchnorm(x @ w + b)); the batch statistics over the M rows of
    # the im2col matmul are exactly BatchNorm2d's (N, OH, OW) reduction.
    y = (
        jnp.dot(x_ref[...], w_ref[...], preferred_element_type=jnp.float32)
        + b_ref[...]
    )
    mean = jnp.mean(y, axis=0, keepdims=True)
    var = jnp.mean((y - mean) ** 2, axis=0, keepdims=True)
    y = (y - mean) * lax.rsqrt(var + EPS)
    o_ref[...] = jnp.maximum(y, 0.0).astype(o_ref.dtype)


def _pool_fc_kernel(p_ref, x_ref, w_ref, b_ref, o_ref):
    # o = (P @ x) @ w + b, where P is the (N, N*S) average-pooling matrix.
    pooled = jnp.dot(p_ref[...], x_ref[...], preferred_element_type=jnp.float32)
    o_ref[...] = (
        jnp.dot(pooled, w_ref[...], preferred_element_type=jnp.float32)
        + b_ref[...]
    ).astype(o_ref.dtype)


# ------------------------------ host wrappers ------------------------------ #

def _extract_patches(x_nhwc, *, ksize=3, stride=2, padding=1):
    """im2col for a 3x3/stride-2/pad-1 conv. Returns (N*OH*OW, k*k*C)."""
    N, H, W, C = x_nhwc.shape
    OH = (H + 2 * padding - ksize) // stride + 1
    OW = (W + 2 * padding - ksize) // stride + 1
    xp = jnp.pad(x_nhwc, ((0, 0), (padding, padding), (padding, padding), (0, 0)))
    cols = []
    for kh in range(ksize):
        for kw in range(ksize):
            cols.append(
                xp[:, kh:kh + stride * OH:stride, kw:kw + stride * OW:stride, :]
            )
    patches = jnp.stack(cols, axis=3)            # (N, OH, OW, k*k, C)
    return patches.reshape(N * OH * OW, ksize * ksize * C), (N, OH, OW)


def _conv_layer(patches, w2d, b2d, *, fuse_bn_relu):
    kernel = _matmul_bias_bn_relu_kernel if fuse_bn_relu else _matmul_bias_kernel
    M, cout = patches.shape[0], w2d.shape[1]
    return pl.pallas_call(
        kernel,
        out_shape=jax.ShapeDtypeStruct((M, cout), patches.dtype),
        in_specs=[_VMEM, _VMEM, _VMEM],
        out_specs=_VMEM,
    )(patches, w2d, b2d)


def init_params(key):
    """PyTorch-layout params: conv weights OIHW, fc weight (out, in)."""
    conv_shapes = [(16, 3, 3, 3), (32, 16, 3, 3), (64, 32, 3, 3), (128, 64, 3, 3)]
    params = {}
    keys = jax.random.split(key, 5)
    for i, (k, s) in enumerate(zip(keys[:4], conv_shapes), start=1):
        fan_in = s[1] * s[2] * s[3]
        bound = 1.0 / jnp.sqrt(float(fan_in))
        kw_, kb_ = jax.random.split(k)
        params[f"conv{i}_w"] = jax.random.uniform(kw_, s, jnp.float32, -bound, bound)
        params[f"conv{i}_b"] = jax.random.uniform(kb_, (s[0],), jnp.float32, -bound, bound)
    kw_, kb_ = jax.random.split(keys[4])
    bound = 1.0 / jnp.sqrt(128.0)
    params["fc_w"] = jax.random.uniform(kw_, (10, 128), jnp.float32, -bound, bound)
    params["fc_b"] = jax.random.uniform(kb_, (10,), jnp.float32, -bound, bound)
    return params


def prepare_params(params):
    """Once-per-model weight layout prep (hoisted out of the forward path)."""
    kp = {}
    for i in range(1, 5):
        w = params[f"conv{i}_w"]                              # (Cout, Cin, 3, 3)
        cout = w.shape[0]
        kp[f"w{i}"] = jnp.transpose(w, (2, 3, 1, 0)).reshape(-1, cout)  # (9*Cin, Cout)
        kp[f"b{i}"] = params[f"conv{i}_b"].reshape(1, cout)
    kp["wfc"] = params["fc_w"].T                              # (128, 10)
    kp["bfc"] = params["fc_b"].reshape(1, 10)
    return kp


def net_forward(x_nchw, kp):
    x = jnp.transpose(x_nchw, (0, 2, 3, 1))                   # NHWC

    # conv12 -> bn23 -> relu (fused)
    p, (N, OH, OW) = _extract_patches(x)
    x = _conv_layer(p, kp["w1"], kp["b1"], fuse_bn_relu=True).reshape(N, OH, OW, -1)

    # conv23 -> bn34 -> relu (fused)
    p, (N, OH, OW) = _extract_patches(x)
    x = _conv_layer(p, kp["w2"], kp["b2"], fuse_bn_relu=True).reshape(N, OH, OW, -1)

    # conv34 -> bn45 -> relu (fused)
    p, (N, OH, OW) = _extract_patches(x)
    x = _conv_layer(p, kp["w3"], kp["b3"], fuse_bn_relu=True).reshape(N, OH, OW, -1)

    # conv45 (no bn/relu)
    p, (N, OH, OW) = _extract_patches(x)
    x4 = _conv_layer(p, kp["w4"], kp["b4"], fuse_bn_relu=False)   # (N*S, 128)

    # global avg pool + fc1, fused into one kernel (pool as a matmul).
    S = OH * OW
    pool = jnp.repeat(jnp.eye(N, dtype=x4.dtype), S, axis=1) / float(S)  # (N, N*S)
    return pl.pallas_call(
        _pool_fc_kernel,
        out_shape=jax.ShapeDtypeStruct((N, kp["wfc"].shape[1]), x4.dtype),
        in_specs=[_VMEM, _VMEM, _VMEM, _VMEM],
        out_specs=_VMEM,
    )(pool, x4, kp["wfc"], kp["bfc"])


# ----------------------------- plain-JAX reference -------------------------- #

def reference_forward(x_nchw, params):
    hp = lax.Precision.HIGHEST

    def conv(x, w, b):
        y = lax.conv_general_dilated(
            x, w, window_strides=(2, 2), padding=((1, 1), (1, 1)),
            dimension_numbers=("NCHW", "OIHW", "NCHW"), precision=hp)
        return y + b[None, :, None, None]

    def bn_relu(x):
        mean = jnp.mean(x, axis=(0, 2, 3), keepdims=True)
        var = jnp.mean((x - mean) ** 2, axis=(0, 2, 3), keepdims=True)
        return jnp.maximum((x - mean) * lax.rsqrt(var + EPS), 0.0)

    x1 = conv(x_nchw, params["conv1_w"], params["conv1_b"])
    x2 = conv(bn_relu(x1), params["conv2_w"], params["conv2_b"])
    x3 = conv(bn_relu(x2), params["conv3_w"], params["conv3_b"])
    x4 = conv(bn_relu(x3), params["conv4_w"], params["conv4_b"])
    pooled = jnp.mean(x4, axis=(2, 3))
    return jnp.dot(pooled, params["fc_w"].T, precision=hp) + params["fc_b"]


if __name__ == "__main__":
    key = jax.random.PRNGKey(0)
    k_x, k_p = jax.random.split(key)

    batch = 2
    # 32x32 input -> spatial 16 -> 8 -> 4 -> 2 through the four stride-2 convs.
    x = jax.random.normal(k_x, (batch, 3, 32, 32), dtype=jnp.float32)

    params = init_params(k_p)
    kparams = prepare_params(params)        # weight-layout prep, done once

    fwd = jax.jit(net_forward)
    out = jax.block_until_ready(fwd(x, kparams))

    ref = reference_forward(x, params)
    assert out.shape == (batch, 10), out.shape
    assert jnp.allclose(out, ref, atol=1e-3, rtol=1e-3), float(
        jnp.max(jnp.abs(out - ref)))

    print("KERNEL_OK")
</pallas_src>

<mosaic_0001>
module attributes {stable_mosaic.version = 11 : i64} {
  func.func @_matmul_bias_bn_relu_kernel(%arg0: memref<512x27xf32, #tpu.memory_space<vmem>>, %arg1: memref<27x16xf32, #tpu.memory_space<vmem>>, %arg2: memref<1x16xf32, #tpu.memory_space<vmem>>, %arg3: memref<512x16xf32, #tpu.memory_space<vmem>>) attributes {dimension_semantics = [], scalar_prefetch = 0 : i64, scratch_operands = 0 : i64, tpu.core_type = #tpu.core_type<tc>} {
    %c0 = arith.constant 0 : index
    %c0_0 = arith.constant 0 : index
    %0 = vector.load %arg0[%c0, %c0_0] : memref<512x27xf32, #tpu.memory_space<vmem>>, vector<512x27xf32>
    %c0_1 = arith.constant 0 : index
    %c0_2 = arith.constant 0 : index
    %1 = vector.load %arg1[%c0_1, %c0_2] : memref<27x16xf32, #tpu.memory_space<vmem>>, vector<27x16xf32>
    %cst = arith.constant dense<0.000000e+00> : vector<512x16xf32>
    %2 = tpu.matmul %0, %1, %cst {dimension_numbers = #tpu.dot_dimension_numbers<[1], [0], [0], [1], [0, 0, 1, 1], [], []>} : vector<512x27xf32>, vector<27x16xf32>, vector<512x16xf32> -> vector<512x16xf32>
    %c0_3 = arith.constant 0 : index
    %c0_4 = arith.constant 0 : index
    %3 = vector.load %arg2[%c0_3, %c0_4] : memref<1x16xf32, #tpu.memory_space<vmem>>, vector<1x16xf32>
    %4 = vector.broadcast %3 : vector<1x16xf32> to vector<512x16xf32>
    %5 = arith.addf %2, %4 : vector<512x16xf32>
    %cst_5 = arith.constant dense<0.000000e+00> : vector<16xf32>
    %6 = vector.multi_reduction <add>, %5, %cst_5 [0] : vector<512x16xf32> to vector<16xf32>
    %7 = vector.shape_cast %6 : vector<16xf32> to vector<1x16xf32>
    %cst_6 = arith.constant 5.120000e+02 : f32
    %8 = vector.broadcast %cst_6 : f32 to vector<1x16xf32>
    %9 = arith.divf %7, %8 : vector<1x16xf32>
    %10 = vector.broadcast %9 : vector<1x16xf32> to vector<512x16xf32>
    %11 = arith.subf %5, %10 : vector<512x16xf32>
    %12 = arith.mulf %11, %11 : vector<512x16xf32>
    %cst_7 = arith.constant dense<0.000000e+00> : vector<16xf32>
    %13 = vector.multi_reduction <add>, %12, %cst_7 [0] : vector<512x16xf32> to vector<16xf32>
    %14 = vector.shape_cast %13 : vector<16xf32> to vector<1x16xf32>
    %cst_8 = arith.constant 5.120000e+02 : f32
    %15 = vector.broadcast %cst_8 : f32 to vector<1x16xf32>
    %16 = arith.divf %14, %15 : vector<1x16xf32>
    %17 = vector.broadcast %9 : vector<1x16xf32> to vector<512x16xf32>
    %18 = arith.subf %5, %17 : vector<512x16xf32>
    %cst_9 = arith.constant 9.99999974E-6 : f32
    %19 = vector.broadcast %cst_9 : f32 to vector<1x16xf32>
    %20 = arith.addf %16, %19 : vector<1x16xf32>
    %21 = math.rsqrt %20 : vector<1x16xf32>
    %22 = vector.broadcast %21 : vector<1x16xf32> to vector<512x16xf32>
    %23 = arith.mulf %18, %22 : vector<512x16xf32>
    %cst_10 = arith.constant 0.000000e+00 : f32
    %24 = vector.broadcast %cst_10 : f32 to vector<512x16xf32>
    %25 = arith.maximumf %23, %24 : vector<512x16xf32>
    %c0_11 = arith.constant 0 : index
    %c0_12 = arith.constant 0 : index
    %26 = vector.load %arg3[%c0_11, %c0_12] : memref<512x16xf32, #tpu.memory_space<vmem>>, vector<512x16xf32>
    tpu.vector_store %arg3[%c0_11, %c0_12], %25 {strides = array<i32>} : memref<512x16xf32, #tpu.memory_space<vmem>>, vector<512x16xf32>,
    return
  }
}

module attributes {stable_mosaic.version = 11 : i64} {
  func.func @_matmul_bias_bn_relu_kernel(%arg0: memref<128x144xf32, #tpu.memory_space<vmem>>, %arg1: memref<144x32xf32, #tpu.memory_space<vmem>>, %arg2: memref<1x32xf32, #tpu.memory_space<vmem>>, %arg3: memref<128x32xf32, #tpu.memory_space<vmem>>) attributes {dimension_semantics = [], scalar_prefetch = 0 : i64, scratch_operands = 0 : i64, tpu.core_type = #tpu.core_type<tc>} {
    %c0 = arith.constant 0 : index
    %c0_0 = arith.constant 0 : index
    %0 = vector.load %arg0[%c0, %c0_0] : memref<128x144xf32, #tpu.memory_space<vmem>>, vector<128x144xf32>
    %c0_1 = arith.constant 0 : index
    %c0_2 = arith.constant 0 : index
    %1 = vector.load %arg1[%c0_1, %c0_2] : memref<144x32xf32, #tpu.memory_space<vmem>>, vector<144x32xf32>
    %cst = arith.constant dense<0.000000e+00> : vector<128x32xf32>
    %2 = tpu.matmul %0, %1, %cst {dimension_numbers = #tpu.dot_dimension_numbers<[1], [0], [0], [1], [0, 0, 1, 1], [], []>} : vector<128x144xf32>, vector<144x32xf32>, vector<128x32xf32> -> vector<128x32xf32>
    %c0_3 = arith.constant 0 : index
    %c0_4 = arith.constant 0 : index
    %3 = vector.load %arg2[%c0_3, %c0_4] : memref<1x32xf32, #tpu.memory_space<vmem>>, vector<1x32xf32>
    %4 = vector.broadcast %3 : vector<1x32xf32> to vector<128x32xf32>
    %5 = arith.addf %2, %4 : vector<128x32xf32>
    %cst_5 = arith.constant dense<0.000000e+00> : vector<32xf32>
    %6 = vector.multi_reduction <add>, %5, %cst_5 [0] : vector<128x32xf32> to vector<32xf32>
    %7 = vector.shape_cast %6 : vector<32xf32> to vector<1x32xf32>
    %cst_6 = arith.constant 1.280000e+02 : f32
    %8 = vector.broadcast %cst_6 : f32 to vector<1x32xf32>
    %9 = arith.divf %7, %8 : vector<1x32xf32>
    %10 = vector.broadcast %9 : vector<1x32xf32> to vector<128x32xf32>
    %11 = arith.subf %5, %10 : vector<128x32xf32>
    %12 = arith.mulf %11, %11 : vector<128x32xf32>
    %cst_7 = arith.constant dense<0.000000e+00> : vector<32xf32>
    %13 = vector.multi_reduction <add>, %12, %cst_7 [0] : vector<128x32xf32> to vector<32xf32>
    %14 = vector.shape_cast %13 : vector<32xf32> to vector<1x32xf32>
    %cst_8 = arith.constant 1.280000e+02 : f32
    %15 = vector.broadcast %cst_8 : f32 to vector<1x32xf32>
    %16 = arith.divf %14, %15 : vector<1x32xf32>
    %17 = vector.broadcast %9 : vector<1x32xf32> to vector<128x32xf32>
    %18 = arith.subf %5, %17 : vector<128x32xf32>
    %cst_9 = arith.constant 9.99999974E-6 : f32
    %19 = vector.broadcast %cst_9 : f32 to vector<1x32xf32>
    %20 = arith.addf %16, %19 : vector<1x32xf32>
    %21 = math.rsqrt %20 : vector<1x32xf32>
    %22 = vector.broadcast %21 : vector<1x32xf32> to vector<128x32xf32>
    %23 = arith.mulf %18, %22 : vector<128x32xf32>
    %cst_10 = arith.constant 0.000000e+00 : f32
    %24 = vector.broadcast %cst_10 : f32 to vector<128x32xf32>
    %25 = arith.maximumf %23, %24 : vector<128x32xf32>
    %c0_11 = arith.constant 0 : index
    %c0_12 = arith.constant 0 : index
    %26 = vector.load %arg3[%c0_11, %c0_12] : memref<128x32xf32, #tpu.memory_space<vmem>>, vector<128x32xf32>
    tpu.vector_store %arg3[%c0_11, %c0_12], %25 {strides = array<i32>} : memref<128x32xf32, #tpu.memory_space<vmem>>, vector<128x32xf32>,
    return
  }
}

module attributes {stable_mosaic.version = 11 : i64} {
  func.func @_matmul_bias_bn_relu_kernel(%arg0: memref<32x288xf32, #tpu.memory_space<vmem>>, %arg1: memref<288x64xf32, #tpu.memory_space<vmem>>, %arg2: memref<1x64xf32, #tpu.memory_space<vmem>>, %arg3: memref<32x64xf32, #tpu.memory_space<vmem>>) attributes {dimension_semantics = [], scalar_prefetch = 0 : i64, scratch_operands = 0 : i64, tpu.core_type = #tpu.core_type<tc>} {
    %c0 = arith.constant 0 : index
    %c0_0 = arith.constant 0 : index
    %0 = vector.load %arg0[%c0, %c0_0] : memref<32x288xf32, #tpu.memory_space<vmem>>, vector<32x288xf32>
    %c0_1 = arith.constant 0 : index
    %c0_2 = arith.constant 0 : index
    %1 = vector.load %arg1[%c0_1, %c0_2] : memref<288x64xf32, #tpu.memory_space<vmem>>, vector<288x64xf32>
    %cst = arith.constant dense<0.000000e+00> : vector<32x64xf32>
    %2 = tpu.matmul %0, %1, %cst {dimension_numbers = #tpu.dot_dimension_numbers<[1], [0], [0], [1], [0, 0, 1, 1], [], []>} : vector<32x288xf32>, vector<288x64xf32>, vector<32x64xf32> -> vector<32x64xf32>
    %c0_3 = arith.constant 0 : index
    %c0_4 = arith.constant 0 : index
    %3 = vector.load %arg2[%c0_3, %c0_4] : memref<1x64xf32, #tpu.memory_space<vmem>>, vector<1x64xf32>
    %4 = vector.broadcast %3 : vector<1x64xf32> to vector<32x64xf32>
    %5 = arith.addf %2, %4 : vector<32x64xf32>
    %cst_5 = arith.constant dense<0.000000e+00> : vector<64xf32>
    %6 = vector.multi_reduction <add>, %5, %cst_5 [0] : vector<32x64xf32> to vector<64xf32>
    %7 = vector.shape_cast %6 : vector<64xf32> to vector<1x64xf32>
    %cst_6 = arith.constant 3.200000e+01 : f32
    %8 = vector.broadcast %cst_6 : f32 to vector<1x64xf32>
    %9 = arith.divf %7, %8 : vector<1x64xf32>
    %10 = vector.broadcast %9 : vector<1x64xf32> to vector<32x64xf32>
    %11 = arith.subf %5, %10 : vector<32x64xf32>
    %12 = arith.mulf %11, %11 : vector<32x64xf32>
    %cst_7 = arith.constant dense<0.000000e+00> : vector<64xf32>
    %13 = vector.multi_reduction <add>, %12, %cst_7 [0] : vector<32x64xf32> to vector<64xf32>
    %14 = vector.shape_cast %13 : vector<64xf32> to vector<1x64xf32>
    %cst_8 = arith.constant 3.200000e+01 : f32
    %15 = vector.broadcast %cst_8 : f32 to vector<1x64xf32>
    %16 = arith.divf %14, %15 : vector<1x64xf32>
    %17 = vector.broadcast %9 : vector<1x64xf32> to vector<32x64xf32>
    %18 = arith.subf %5, %17 : vector<32x64xf32>
    %cst_9 = arith.constant 9.99999974E-6 : f32
    %19 = vector.broadcast %cst_9 : f32 to vector<1x64xf32>
    %20 = arith.addf %16, %19 : vector<1x64xf32>
    %21 = math.rsqrt %20 : vector<1x64xf32>
    %22 = vector.broadcast %21 : vector<1x64xf32> to vector<32x64xf32>
    %23 = arith.mulf %18, %22 : vector<32x64xf32>
    %cst_10 = arith.constant 0.000000e+00 : f32
    %24 = vector.broadcast %cst_10 : f32 to vector<32x64xf32>
    %25 = arith.maximumf %23, %24 : vector<32x64xf32>
    %c0_11 = arith.constant 0 : index
    %c0_12 = arith.constant 0 : index
    %26 = vector.load %arg3[%c0_11, %c0_12] : memref<32x64xf32, #tpu.memory_space<vmem>>, vector<32x64xf32>
    tpu.vector_store %arg3[%c0_11, %c0_12], %25 {strides = array<i32>} : memref<32x64xf32, #tpu.memory_space<vmem>>, vector<32x64xf32>,
    return
  }
}

module attributes {stable_mosaic.version = 11 : i64} {
  func.func @_matmul_bias_kernel(%arg0: memref<8x576xf32, #tpu.memory_space<vmem>>, %arg1: memref<576x128xf32, #tpu.memory_space<vmem>>, %arg2: memref<1x128xf32, #tpu.memory_space<vmem>>, %arg3: memref<8x128xf32, #tpu.memory_space<vmem>>) attributes {dimension_semantics = [], scalar_prefetch = 0 : i64, scratch_operands = 0 : i64, tpu.core_type = #tpu.core_type<tc>} {
    %c0 = arith.constant 0 : index
    %c0_0 = arith.constant 0 : index
    %0 = vector.load %arg0[%c0, %c0_0] : memref<8x576xf32, #tpu.memory_space<vmem>>, vector<8x576xf32>
    %c0_1 = arith.constant 0 : index
    %c0_2 = arith.constant 0 : index
    %1 = vector.load %arg1[%c0_1, %c0_2] : memref<576x128xf32, #tpu.memory_space<vmem>>, vector<576x128xf32>
    %cst = arith.constant dense<0.000000e+00> : vector<8x128xf32>
    %2 = tpu.matmul %0, %1, %cst {dimension_numbers = #tpu.dot_dimension_numbers<[1], [0], [0], [1], [0, 0, 1, 1], [], []>} : vector<8x576xf32>, vector<576x128xf32>, vector<8x128xf32> -> vector<8x128xf32>
    %c0_3 = arith.constant 0 : index
    %c0_4 = arith.constant 0 : index
    %3 = vector.load %arg2[%c0_3, %c0_4] : memref<1x128xf32, #tpu.memory_space<vmem>>, vector<1x128xf32>
    %4 = vector.broadcast %3 : vector<1x128xf32> to vector<8x128xf32>
    %5 = arith.addf %2, %4 : vector<8x128xf32>
    %c0_5 = arith.constant 0 : index
    %c0_6 = arith.constant 0 : index
    %6 = vector.load %arg3[%c0_5, %c0_6] : memref<8x128xf32, #tpu.memory_space<vmem>>, vector<8x128xf32>
    tpu.vector_store %arg3[%c0_5, %c0_6], %5 {strides = array<i32>} : memref<8x128xf32, #tpu.memory_space<vmem>>, vector<8x128xf32>,
    return
  }
}

module attributes {stable_mosaic.version = 11 : i64} {
  func.func @_pool_fc_kernel(%arg0: memref<2x8xf32, #tpu.memory_space<vmem>>, %arg1: memref<8x128xf32, #tpu.memory_space<vmem>>, %arg2: memref<128x10xf32, #tpu.memory_space<vmem>>, %arg3: memref<1x10xf32, #tpu.memory_space<vmem>>, %arg4: memref<2x10xf32, #tpu.memory_space<vmem>>) attributes {dimension_semantics = [], scalar_prefetch = 0 : i64, scratch_operands = 0 : i64, tpu.core_type = #tpu.core_type<tc>} {
    %c0 = arith.constant 0 : index
    %c0_0 = arith.constant 0 : index
    %0 = vector.load %arg0[%c0, %c0_0] : memref<2x8xf32, #tpu.memory_space<vmem>>, vector<2x8xf32>
    %c0_1 = arith.constant 0 : index
    %c0_2 = arith.constant 0 : index
    %1 = vector.load %arg1[%c0_1, %c0_2] : memref<8x128xf32, #tpu.memory_space<vmem>>, vector<8x128xf32>
    %cst = arith.constant dense<0.000000e+00> : vector<2x128xf32>
    %2 = tpu.matmul %0, %1, %cst {dimension_numbers = #tpu.dot_dimension_numbers<[1], [0], [0], [1], [0, 0, 1, 1], [], []>} : vector<2x8xf32>, vector<8x128xf32>, vector<2x128xf32> -> vector<2x128xf32>
    %c0_3 = arith.constant 0 : index
    %c0_4 = arith.constant 0 : index
    %3 = vector.load %arg2[%c0_3, %c0_4] : memref<128x10xf32, #tpu.memory_space<vmem>>, vector<128x10xf32>
    %cst_5 = arith.constant dense<0.000000e+00> : vector<2x10xf32>
    %4 = tpu.matmul %2, %3, %cst_5 {dimension_numbers = #tpu.dot_dimension_numbers<[1], [0], [0], [1], [0, 0, 1, 1], [], []>} : vector<2x128xf32>, vector<128x10xf32>, vector<2x10xf32> -> vector<2x10xf32>
    %c0_6 = arith.constant 0 : index
    %c0_7 = arith.constant 0 : index
    %5 = vector.load %arg3[%c0_6, %c0_7] : memref<1x10xf32, #tpu.memory_space<vmem>>, vector<1x10xf32>
    %6 = vector.broadcast %5 : vector<1x10xf32> to vector<2x10xf32>
    %7 = arith.addf %4, %6 : vector<2x10xf32>
    %c0_8 = arith.constant 0 : index
    %c0_9 = arith.constant 0 : index
    %8 = vector.load %arg4[%c0_8, %c0_9] : memref<2x10xf32, #tpu.memory_space<vmem>>, vector<2x10xf32>
    tpu.vector_store %arg4[%c0_8, %c0_9], %7 {strides = array<i32>} : memref<2x10xf32, #tpu.memory_space<vmem>>, vector<2x10xf32>,
    return
  }
}

</mosaic_0001>

<llo_original>
// kernel: net_forward.5
$region0: #{net_forward.5}
  #allocation0 [shape = 'u32[]', space=smem, size = 0x4, offset = 0x4, fixed_abs, tag = 'smem constant byte address 0x4 - core index']
  #allocation1 [shape = 'u32[144,128]{1,0:T(1,128)}', space=vmem, size = 0x12000, scoped, tag = 'internal scratch']
  %s0 = inlined_call_operand.vmem [shape: f32[512,27], index: 0, kind: input, shape index: {}]
  %s1 = inlined_call_operand.vmem [shape: f32[27,16], index: 1, kind: input, shape index: {}]
  %s2 = inlined_call_operand.vmem [shape: f32[1,16], index: 2, kind: input, shape index: {}]
  %s3 = inlined_call_operand.vmem [shape: f32[512,16], index: 3, kind: output, shape index: {}]
  %s4 = sld [smem:[#allocation0]]
  $region22: #{net_forward.5} parent=0
    _
  %s6 = ssub.s32 1, %s4
  %s7 = scalar_select 0, %s6, %s4
  // Predicated region
  $region2: #{net_forward.5} parent=0 // pred_check
    _
  $region3: #{net_forward.5} parent=0 // pred_check_branch
    %9 = sbr.rel (0) target = $region5
  $region4: #{net_forward.5} parent=0 // pred_region
    _
  $region5: #{net_forward.5} parent=0 // pred_fallthru
    _
  // Predicated region
  $region6: #{net_forward.5} parent=0 // pred_check
    _
  $region7: #{net_forward.5} parent=0 // pred_check_branch
    %11 = sbr.rel (0) target = $region9
  $region8: #{net_forward.5} parent=0 // pred_region
    _
  $region9: #{net_forward.5} parent=0 // pred_fallthru
    _
  // Predicated region
  $region10: #{net_forward.5} parent=0 // pred_check
    _
  $region11: #{net_forward.5} parent=0 // pred_check_branch
    %13 = sbr.rel (0) target = $region13
  $region12: #{net_forward.5} parent=0 // pred_region
    _
  $region13: #{net_forward.5} parent=0 // pred_fallthru
    _
  %v14 = vld [vmem:[%s0] sm:$0xff]
  %v15 = vld [vmem:[%s0 + $0x8] sm:$0xff]
  %v16 = vld [vmem:[%s0 + $0x10] sm:$0xff]
  %v17 = vld [vmem:[%s0 + $0x18] sm:$0xff]
  %v18 = vld [vmem:[%s0 + $0x20] sm:$0xff]
  %v19 = vld [vmem:[%s0 + $0x28] sm:$0xff]
  %v20 = vld [vmem:[%s0 + $0x30] sm:$0xff]
  %v21 = vld [vmem:[%s0 + $0x38] sm:$0xff]
  %v22 = vld [vmem:[%s0 + $0x40] sm:$0xff]
  %v23 = vld [vmem:[%s0 + $0x48] sm:$0xff]
  %v24 = vld [vmem:[%s0 + $0x50] sm:$0xff]
  %v25 = vld [vmem:[%s0 + $0x58] sm:$0xff]
  %v26 = vld [vmem:[%s0 + $0x60] sm:$0xff]
  %v27 = vld [vmem:[%s0 + $0x68] sm:$0xff]
  %v28 = vld [vmem:[%s0 + $0x70] sm:$0xff]
  %v29 = vld [vmem:[%s0 + $0x78] sm:$0xff]
  %v30 = vld [vmem:[%s0 + $0x80] sm:$0xff]
  %v31 = vld [vmem:[%s0 + $0x88] sm:$0xff]
  %v32 = vld [vmem:[%s0 + $0x90] sm:$0xff]
  %v33 = vld [vmem:[%s0 + $0x98] sm:$0xff]
  %v34 = vld [vmem:[%s0 + $0xa0] sm:$0xff]
  %v35 = vld [vmem:[%s0 + $0xa8] sm:$0xff]
  %v36 = vld [vmem:[%s0 + $0xb0] sm:$0xff]
  %v37 = vld [vmem:[%s0 + $0xb8] sm:$0xff]
  %v38 = vld [vmem:[%s0 + $0xc0] sm:$0xff]
  %v39 = vld [vmem:[%s0 + $0xc8] sm:$0xff]
  %v40 = vld [vmem:[%s0 + $0xd0] sm:$0xff]
  %v41 = vld [vmem:[%s0 + $0xd8] sm:$0xff]
  %v42 = vld [vmem:[%s0 + $0xe0] sm:$0xff]
  %v43 = vld [vmem:[%s0 + $0xe8] sm:$0xff]
  %v44 = vld [vmem:[%s0 + $0xf0] sm:$0xff]
  %v45 = vld [vmem:[%s0 + $0xf8] sm:$0xff]
  %v46 = vld [vmem:[%s0 + $0x100] sm:$0xff]
  %v47 = vld [vmem:[%s0 + $0x108] sm:$0xff]
  %v48 = vld [vmem:[%s0 + $0x110] sm:$0xff]
  %v49 = vld [vmem:[%s0 + $0x118] sm:$0xff]
  %v50 = vld [vmem:[%s0 + $0x120] sm:$0xff]
  %v51 = vld [vmem:[%s0 + $0x128] sm:$0xff]
  %v52 = vld [vmem:[%s0 + $0x130] sm:$0xff]
  %v53 = vld [vmem:[%s0 + $0x138] sm:$0xff]
  %v54 = vld [vmem:[%s0 + $0x140] sm:$0xff]
  %v55 = vld [vmem:[%s0 + $0x148] sm:$0xff]
  %v56 = vld [vmem:[%s0 + $0x150] sm:$0xff]
  %v57 = vld [vmem:[%s0 + $0x158] sm:$0xff]
  %v58 = vld [vmem:[%s0 + $0x160] sm:$0xff]
  %v59 = vld [vmem:[%s0 + $0x168] sm:$0xff]
  %v60 = vld [vmem:[%s0 + $0x170] sm:$0xff]
  %v61 = vld [vmem:[%s0 + $0x178] sm:$0xff]
  %v62 = vld [vmem:[%s0 + $0x180] sm:$0xff]
  %v63 = vld [vmem:[%s0 + $0x188] sm:$0xff]
  %v64 = vld [vmem:[%s0 + $0x190] sm:$0xff]
  %v65 = vld [vmem:[%s0 + $0x198] sm:$0xff]
  %v66 = vld [vmem:[%s0 + $0x1a0] sm:$0xff]
  %v67 = vld [vmem:[%s0 + $0x1a8] sm:$0xff]
  %v68 = vld [vmem:[%s0 + $0x1b0] sm:$0xff]
  %v69 = vld [vmem:[%s0 + $0x1b8] sm:$0xff]
  %v70 = vld [vmem:[%s0 + $0x1c0] sm:$0xff]
  %v71 = vld [vmem:[%s0 + $0x1c8] sm:$0xff]
  %v72 = vld [vmem:[%s0 + $0x1d0] sm:$0xff]
  %v73 = vld [vmem:[%s0 + $0x1d8] sm:$0xff]
  %v74 = vld [vmem:[%s0 + $0x1e0] sm:$0xff]
  %v75 = vld [vmem:[%s0 + $0x1e8] sm:$0xff]
  %v76 = vld [vmem:[%s0 + $0x1f0] sm:$0xff]
  %v77 = vld [vmem:[%s0 + $0x1f8] sm:$0xff]
  %v78 = vld [vmem:[%s1] sm:$0xff]
  %v79 = vld [vmem:[%s1 + $0x8] sm:$0xff]
  %v80 = vld [vmem:[%s1 + $0x10] sm:$0xff]
  %v81 = vld [vmem:[%s1 + $0x18] sm:$0x7]
  %v82 = vld [vmem:[%s2] sm:$0x1]
  %v84 = vlaneseq
  %v85 = vshrl.u32 %v84, 7
  %v86 = vsub.s32 0, %v85
  %v87 = vrot.slane %v82, %v86
  %vm89 = vcmask 220160
  %v91 = vsel %vm89, %v14, 0
  %v94 = vsel %vm89, %v15, 0
  %v97 = vsel %vm89, %v16, 0
  %v100 = vsel %vm89, %v17, 0
  %v103 = vsel %vm89, %v18, 0
  %v106 = vsel %vm89, %v19, 0
  %v109 = vsel %vm89, %v20, 0
  %v112 = vsel %vm89, %v21, 0
  %v115 = vsel %vm89, %v22, 0
  %v118 = vsel %vm89, %v23, 0
  %v121 = vsel %vm89, %v24, 0
  %v124 = vsel %vm89, %v25, 0
  %v127 = vsel %vm89, %v26, 0
  %v130 = vsel %vm89, %v27, 0
  %v133 = vsel %vm89, %v28, 0
  %v136 = vsel %vm89, %v29, 0
  %v139 = vsel %vm89, %v30, 0
  %v142 = vsel %vm89, %v31, 0
  %v145 = vsel %vm89, %v32, 0
  %v148 = vsel %vm89, %v33, 0
  %v151 = vsel %vm89, %v34, 0
  %v154 = vsel %vm89, %v35, 0
  %v157 = vsel %vm89, %v36, 0
  %v160 = vsel %vm89, %v37, 0
  %v163 = vsel %vm89, %v38, 0
  %v166 = vsel %vm89, %v39, 0
  %v169 = vsel %vm89, %v40, 0
  %v172 = vsel %vm89, %v41, 0
  %v175 = vsel %vm89, %v42, 0
  %v178 = vsel %vm89, %v43, 0
  %v181 = vsel %vm89, %v44, 0
  %v184 = vsel %vm89, %v45, 0
  %v187 = vsel %vm89, %v46, 0
  %v190 = vsel %vm89, %v47, 0
  %v193 = vsel %vm89, %v48, 0
  %v196 = vsel %vm89, %v49, 0
  %v199 = vsel %vm89, %v50, 0
  %v202 = vsel %vm89, %v51, 0
  %v205 = vsel %vm89, %v52, 0
  %v208 = vsel %vm89, %v53, 0
  %v211 = vsel %vm89, %v54, 0
  %v214 = vsel %vm89, %v55, 0
  %v217 = vsel %vm89, %v56, 0
  %v220 = vsel %vm89, %v57, 0
  %v223 = vsel %vm89, %v58, 0
  %v226 = vsel %vm89, %v59, 0
  %v229 = vsel %vm89, %v60, 0
  %v232 = vsel %vm89, %v61, 0
  %v235 = vsel %vm89, %v62, 0
  %v238 = vsel %vm89, %v63, 0
  %v241 = vsel %vm89, %v64, 0
  %v244 = vsel %vm89, %v65, 0
  %v247 = vsel %vm89, %v66, 0
  %v250 = vsel %vm89, %v67, 0
  %v253 = vsel %vm89, %v68, 0
  %v256 = vsel %vm89, %v69, 0
  %v259 = vsel %vm89, %v70, 0
  %v262 = vsel %vm89, %v71, 0
  %v265 = vsel %vm89, %v72, 0
  %v268 = vsel %vm89, %v73, 0
  %v271 = vsel %vm89, %v74, 0
  %v274 = vsel %vm89, %v75, 0
  %v277 = vsel %vm89, %v76, 0
  %v280 = vsel %vm89, %v77, 0
  %vm282 = vcmask 1042432
  %v284 = vsel %vm282, %v81, 0
  %286 = vmatprep.subr.mxu0 0.0
  %287 = vmatpush1.msra.mxu0 %v78
  %288 = vmatprep.subr.mxu0 0.0
  %289 = vmatpush1.msra.mxu0 %v79
  %290 = vmatprep.subr.mxu0 0.0
  %291 = vmatpush1.msra.mxu0 %v80
  %292 = vmatprep.subr.mxu0 0.0
  %293 = vmatpush1.msra.mxu0 %v284
  %294 = vmatprep.subr.mxu0 0.0
  %295 = vmatpush1.msra.mxu0 0.0
  %296 = vmatprep.subr.mxu0 0.0
  %297 = vmatpush1.msra.mxu0 0.0
  %298 = vmatprep.subr.mxu0 0.0
  %299 = vmatpush1.msra.mxu0 0.0
  %300 = vmatprep.subr.mxu0 0.0
  %301 = vmatpush1.msra.mxu0 0.0
  %302 = vmatprep.subr.mxu0 0.0
  %303 = vmatpush1.msra.mxu0 0.0
  %304 = vmatprep.subr.mxu0 0.0
  %305 = vmatpush1.msra.mxu0 0.0
  %306 = vmatprep.subr.mxu0 0.0
  %307 = vmatpush1.msra.mxu0 0.0
  %308 = vmatprep.subr.mxu0 0.0
  %309 = vmatpush1.msra.mxu0 0.0
  %310 = vmatprep.subr.mxu0 0.0
  %311 = vmatpush1.msra.mxu0 0.0
  %312 = vmatprep.subr.mxu0 0.0
  %313 = vmatpush1.msra.mxu0 0.0
  %314 = vmatprep.subr.mxu0 0.0
  %315 = vmatpush1.msra.mxu0 0.0
  %316 = vmatprep.subr.mxu0 0.0
  %317 = vmatpush1.msra.mxu0 0.0
  %318 = vmatprep.subr.mxu0 0.0
  %319 = vmatpush1.msra.mxu0 0.0
  %320 = vmatprep.subr.mxu0 0.0
  %321 = vmatpush1.msra.mxu0 0.0
  %322 = vmatprep.subr.mxu0 0.0
  %323 = vmatpush1.msra.mxu0 0.0
  %324 = vmatprep.subr.mxu0 0.0
  %325 = vmatpush1.msra.mxu0 0.0
  %326 = vmatprep.subr.mxu0 0.0
  %327 = vmatpush1.msra.mxu0 0.0
  %328 = vmatprep.subr.mxu0 0.0
  %329 = vmatpush1.msra.mxu0 0.0
  %330 = vmatprep.subr.mxu0 0.0
  %331 = vmatpush1.msra.mxu0 0.0
  %332 = vmatprep.subr.mxu0 0.0
  %333 = vmatpush1.msra.mxu0 0.0
  %334 = vmatprep.subr.mxu0 0.0
  %335 = vmatpush1.msra.mxu0 0.0
  %336 = vmatprep.subr.mxu0 0.0
  %337 = vmatpush1.msra.mxu0 0.0
  %338 = vmatprep.subr.mxu0 0.0
  %339 = vmatpush1.msra.mxu0 0.0
  %340 = vmatprep.subr.mxu0 0.0
  %341 = vmatpush1.msra.mxu0 0.0
  %342 = vmatprep.subr.mxu0 0.0
  %343 = vmatpush1.msra.mxu0 0.0
  %344 = vmatprep.subr.mxu0 0.0
  %345 = vmatpush1.msra.mxu0 0.0
  %346 = vmatprep.subr.mxu0 0.0
  %347 = vmatpush1.msra.mxu0 0.0
  %348 = vmatprep.subr.mxu0 0.0
  %349 = vmatpush1.msra.mxu0 0.0
  %350 = vmatprep.mubr.f32.mxu0 0.0
  %351 = vmatmul.mubr.f32.gmra.mrb[0].mxu0 %v91
  %v352 = vpop.f32.mrb[0].mxu0
  %v353 = vadd.f32 %v87, %v352
  %v354 = vpop.f32.mrb[0].mxu0
  %355 = vmatprep.mubr.f32.mxu0 0.0
  %356 = vmatmul.mubr.f32.gmra.mrb[0].mxu0 %v94
  %v357 = vpop.f32.mrb[0].mxu0
  %v358 = vadd.f32 %v87, %v357
  %v359 = vpop.f32.mrb[0].mxu0
  %360 = vmatprep.mubr.f32.mxu0 0.0
  %361 = vmatmul.mubr.f32.gmra.mrb[0].mxu0 %v97
  %v362 = vpop.f32.mrb[0].mxu0
  %v363 = vadd.f32 %v87, %v362
  %v364 = vpop.f32.mrb[0].mxu0
  %365 = vmatprep.mubr.f32.mxu0 0.0
  %366 = vmatmul.mubr.f32.gmra.mrb[0].mxu0 %v100
  %v367 = vpop.f32.mrb[0].mxu0
  %v368 = vadd.f32 %v87, %v367
  %v369 = vpop.f32.mrb[0].mxu0
  %370 = vmatprep.mubr.f32.mxu0 0.0
  %371 = vmatmul.mubr.f32.gmra.mrb[0].mxu0 %v103
  %v372 = vpop.f32.mrb[0].mxu0
  %v373 = vadd.f32 %v87, %v372
  %v374 = vpop.f32.mrb[0].mxu0
  %375 = vmatprep.mubr.f32.mxu0 0.0
  %376 = vmatmul.mubr.f32.gmra.mrb[0].mxu0 %v106
  %v377 = vpop.f32.mrb[0].mxu0
  %v378 = vadd.f32 %v87, %v377
  %v379 = vpop.f32.mrb[0].mxu0
  %380 = vmatprep.mubr.f32.mxu0 0.0
  %381 = vmatmul.mubr.f32.gmra.mrb[0].mxu0 %v109
  %v382 = vpop.f32.mrb[0].mxu0
  %v383 = vadd.f32 %v87, %v382
  %v384 = vpop.f32.mrb[0].mxu0
  %385 = vmatprep.mubr.f32.mxu0 0.0
  %386 = vmatmul.mubr.f32.gmra.mrb[0].mxu0 %v112
  %v387 = vpop.f32.mrb[0].mxu0
  %v388 = vadd.f32 %v87, %v387
  %v389 = vpop.f32.mrb[0].mxu0
  %390 = vmatprep.mubr.f32.mxu0 0.0
  %391 = vmatmul.mubr.f32.gmra.mrb[0].mxu0 %v115
  %v392 = vpop.f32.mrb[0].mxu0
  %v393 = vadd.f32 %v87, %v392
  %v394 = vpop.f32.mrb[0].mxu0
  %395 = vmatprep.mubr.f32.mxu0 0.0
  %396 = vmatmul.mubr.f32.gmra.mrb[0].mxu0 %v118
  %v397 = vpop.f32.mrb[0].mxu0
  %v398 = vadd.f32 %v87, %v397
  %v399 = vpop.f32.mrb[0].mxu0
  %400 = vmatprep.mubr.f32.mxu0 0.0
  %401 = vmatmul.mubr.f32.gmra.mrb[0].mxu0 %v121
  %v402 = vpop.f32.mrb[0].mxu0
  %v403 = vadd.f32 %v87, %v402
  %v404 = vpop.f32.mrb[0].mxu0
  %405 = vmatprep.mubr.f32.mxu0 0.0
  %406 = vmatmul.mubr.f32.gmra.mrb[0].mxu0 %v124
  %v407 = vpop.f32.mrb[0].mxu0
  %v408 = vadd.f32 %v87, %v407
  %v409 = vpop.f32.mrb[0].mxu0
  %410 = vmatprep.mubr.f32.mxu0 0.0
  %411 = vmatmul.mubr.f32.gmra.mrb[0].mxu0 %v127
  %v412 = vpop.f32.mrb[0].mxu0
  %v413 = vadd.f32 %v87, %v412
  %v414 = vpop.f32.mrb[0].mxu0
  %415 = vmatprep.mubr.f32.mxu0 0.0
  %416 = vmatmul.mubr.f32.gmra.mrb[0].mxu0 %v130
  %v417 = vpop.f32.mrb[0].mxu0
  %v418 = vadd.f32 %v87, %v417
  %v419 = vpop.f32.mrb[0].mxu0
  %420 = vmatprep.mubr.f32.mxu0 0.0
  %421 = vmatmul.mubr.f32.gmra.mrb[0].mxu0 %v133
  %v422 = vpop.f32.mrb[0].mxu0
  %v423 = vadd.f32 %v87, %v422
  %v424 = vpop.f32.mrb[0].mxu0
  %425 = vmatprep.mubr.f32.mxu0 0.0
  %426 = vmatmul.mubr.f32.gmra.mrb[0].mxu0 %v136
  %v427 = vpop.f32.mrb[0].mxu0
  %v428 = vadd.f32 %v87, %v427
  %v429 = vpop.f32.mrb[0].mxu0
  %430 = vmatprep.mubr.f32.mxu0 0.0
  %431 = vmatmul.mubr.f32.gmra.mrb[0].mxu0 %v139
  %v432 = vpop.f32.mrb[0].mxu0
  %v433 = vadd.f32 %v87, %v432
  %v434 = vpop.f32.mrb[0].mxu0
  %435 = vmatprep.mubr.f32.mxu0 0.0
  %436 = vmatmul.mubr.f32.gmra.mrb[0].mxu0 %v142
  %v437 = vpop.f32.mrb[0].mxu0
  %v438 = vadd.f32 %v87, %v437
  %v439 = vpop.f32.mrb[0].mxu0
  %440 = vmatprep.mubr.f32.mxu0 0.0
  %441 = vmatmul.mubr.f32.gmra.mrb[0].mxu0 %v145
  %v442 = vpop.f32.mrb[0].mxu0
  %v443 = vadd.f32 %v87, %v442
  %v444 = vpop.f32.mrb[0].mxu0
  %445 = vmatprep.mubr.f32.mxu0 0.0
  %446 = vmatmul.mubr.f32.gmra.mrb[0].mxu0 %v148
  %v447 = vpop.f32.mrb[0].mxu0
  %v448 = vadd.f32 %v87, %v447
  %v449 = vpop.f32.mrb[0].mxu0
  %450 = vmatprep.mubr.f32.mxu0 0.0
  %451 = vmatmul.mubr.f32.gmra.mrb[0].mxu0 %v151
  %v452 = vpop.f32.mrb[0].mxu0
  %v453 = vadd.f32 %v87, %v452
  %v454 = vpop.f32.mrb[0].mxu0
  %455 = vmatprep.mubr.f32.mxu0 0.0
  %456 = vmatmul.mubr.f32.gmra.mrb[0].mxu0 %v154
  %v457 = vpop.f32.mrb[0].mxu0
  %v458 = vadd.f32 %v87, %v457
  %v459 = vpop.f32.mrb[0].mxu0
  %460 = vmatprep.mubr.f32.mxu0 0.0
  %461 = vmatmul.mubr.f32.gmra.mrb[0].mxu0 %v157
  %v462 = vpop.f32.mrb[0].mxu0
  %v463 = vadd.f32 %v87, %v462
  %v464 = vpop.f32.mrb[0].mxu0
  %465 = vmatprep.mubr.f32.mxu0 0.0
  %466 = vmatmul.mubr.f32.gmra.mrb[0].mxu0 %v160
  %v467 = vpop.f32.mrb[0].mxu0
  %v468 = vadd.f32 %v87, %v467
  %v469 = vpop.f32.mrb[0].mxu0
  %470 = vmatprep.mubr.f32.mxu0 0.0
  %471 = vmatmul.mubr.f32.gmra.mrb[0].mxu0 %v163
  %v472 = vpop.f32.mrb[0].mxu0
  %v473 = vadd.f32 %v87, %v472
  %v474 = vpop.f32.mrb[0].mxu0
  %475 = vmatprep.mubr.f32.mxu0 0.0
  %476 = vmatmul.mubr.f32.gmra.mrb[0].mxu0 %v166
  %v477 = vpop.f32.mrb[0].mxu0
  %v478 = vadd.f32 %v87, %v477
  %v479 = vpop.f32.mrb[0].mxu0
  %480 = vmatprep.mubr.f32.mxu0 0.0
  %481 = vmatmul.mubr.f32.gmra.mrb[0].mxu0 %v169
  %v482 = vpop.f32.mrb[0].mxu0
  %v483 = vadd.f32 %v87, %v482
  %v484 = vpop.f32.mrb[0].mxu0
  %485 = vmatprep.mubr.f32.mxu0 0.0
  %486 = vmatmul.mubr.f32.gmra.mrb[0].mxu0 %v172
  %v487 = vpop.f32.mrb[0].mxu0
  %v488 = vadd.f32 %v87, %v487
  %v489 = vpop.f32.mrb[0].mxu0
  %490 = vmatprep.mubr.f32.mxu0 0.0
  %491 = vmatmul.mubr.f32.gmra.mrb[0].mxu0 %v175
  %v492 = vpop.f32.mrb[0].mxu0
  %v493 = vadd.f32 %v87, %v492
  %v494 = vpop.f32.mrb[0].mxu0
  %495 = vmatprep.mubr.f32.mxu0 0.0
  %496 = vmatmul.mubr.f32.gmra.mrb[0].mxu0 %v178
  %v497 = vpop.f32.mrb[0].mxu0
  %v498 = vadd.f32 %v87, %v497
  %v499 = vpop.f32.mrb[0].mxu0
  %500 = vmatprep.mubr.f32.mxu0 0.0
  %501 = vmatmul.mubr.f32.gmra.mrb[0].mxu0 %v181
  %v502 = vpop.f32.mrb[0].mxu0
  %v503 = vadd.f32 %v87, %v502
  %v504 = vpop.f32.mrb[0].mxu0
  %505 = vmatprep.mubr.f32.mxu0 0.0
  %506 = vmatmul.mubr.f32.gmra.mrb[0].mxu0 %v184
  %v507 = vpop.f32.mrb[0].mxu0
  %v508 = vadd.f32 %v87, %v507
  %v509 = vpop.f32.mrb[0].mxu0
  %510 = vmatprep.mubr.f32.mxu0 0.0
  %511 = vmatmul.mubr.f32.gmra.mrb[0].mxu0 %v187
  %v512 = vpop.f32.mrb[0].mxu0
  %v513 = vadd.f32 %v87, %v512
  %v514 = vpop.f32.mrb[0].mxu0
  %515 = vmatprep.mubr.f32.mxu0 0.0
  %516 = vmatmul.mubr.f32.gmra.mrb[0].mxu0 %v190
  %v517 = vpop.f32.mrb[0].mxu0
  %v518 = vadd.f32 %v87, %v517
  %v519 = vpop.f32.mrb[0].mxu0
  %520 = vmatprep.mubr.f32.mxu0 0.0
  %521 = vmatmul.mubr.f32.gmra.mrb[0].mxu0 %v193
  %v522 = vpop.f32.mrb[0].mxu0
  %v523 = vadd.f32 %v87, %v522
  %v524 = vpop.f32.mrb[0].mxu0
  %525 = vmatprep.mubr.f32.mxu0 0.0
  %526 = vmatmul.mubr.f32.gmra.mrb[0].mxu0 %v196
  %v527 = vpop.f32.mrb[0].mxu0
  %v528 = vadd.f32 %v87, %v527
  %v529 = vpop.f32.mrb[0].mxu0
  %530 = vmatprep.mubr.f32.mxu0 0.0
  %531 = vmatmul.mubr.f32.gmra.mrb[0].mxu0 %v199
  %v532 = vpop.f32.mrb[0].mxu0
  %v533 = vadd.f32 %v87, %v532
  %v534 = vpop.f32.mrb[0].mxu0
  %535 = vmatprep.mubr.f32.mxu0 0.0
  %536 = vmatmul.mubr.f32.gmra.mrb[0].mxu0 %v202
  %v537 = vpop.f32.mrb[0].mxu0
  %v538 = vadd.f32 %v87, %v537
  %v539 = vpop.f32.mrb[0].mxu0
  %540 = vmatprep.mubr.f32.mxu0 0.0
  %541 = vmatmul.mubr.f32.gmra.mrb[0].mxu0 %v205
  %v542 = vpop.f32.mrb[0].mxu0
  %v543 = vadd.f32 %v87, %v542
  %v544 = vpop.f32.mrb[0].mxu0
  %545 = vmatprep.mubr.f32.mxu0 0.0
  %546 = vmatmul.mubr.f32.gmra.mrb[0].mxu0 %v208
  %v547 = vpop.f32.mrb[0].mxu0
  %v548 = vadd.f32 %v87, %v547
  %v549 = vpop.f32.mrb[0].mxu0
  %550 = vmatprep.mubr.f32.mxu0 0.0
  %551 = vmatmul.mubr.f32.gmra.mrb[0].mxu0 %v211
  %v552 = vpop.f32.mrb[0].mxu0
  %v553 = vadd.f32 %v87, %v552
  %v554 = vpop.f32.mrb[0].mxu0
  %555 = vmatprep.mubr.f32.mxu0 0.0
  %556 = vmatmul.mubr.f32.gmra.mrb[0].mxu0 %v214
  %v557 = vpop.f32.mrb[0].mxu0
  %v558 = vadd.f32 %v87, %v557
  %v559 = vpop.f32.mrb[0].mxu0
  %560 = vmatprep.mubr.f32.mxu0 0.0
  %561 = vmatmul.mubr.f32.gmra.mrb[0].mxu0 %v217
  %v562 = vpop.f32.mrb[0].mxu0
  %v563 = vadd.f32 %v87, %v562
  %v564 = vpop.f32.mrb[0].mxu0
  %565 = vmatprep.mubr.f32.mxu0 0.0
  %566 = vmatmul.mubr.f32.gmra.mrb[0].mxu0 %v220
  %v567 = vpop.f32.mrb[0].mxu0
  %v568 = vadd.f32 %v87, %v567
  %v569 = vpop.f32.mrb[0].mxu0
  %570 = vmatprep.mubr.f32.mxu0 0.0
  %571 = vmatmul.mubr.f32.gmra.mrb[0].mxu0 %v223
  %v572 = vpop.f32.mrb[0].mxu0
  %v573 = vadd.f32 %v87, %v572
  %v574 = vpop.f32.mrb[0].mxu0
  %575 = vmatprep.mubr.f32.mxu0 0.0
  %576 = vmatmul.mubr.f32.gmra.mrb[0].mxu0 %v226
  %v577 = vpop.f32.mrb[0].mxu0
  %v578 = vadd.f32 %v87, %v577
  %v579 = vpop.f32.mrb[0].mxu0
  %580 = vmatprep.mubr.f32.mxu0 0.0
  %581 = vmatmul.mubr.f32.gmra.mrb[0].mxu0 %v229
  %v582 = vpop.f32.mrb[0].mxu0
  %v583 = vadd.f32 %v87, %v582
  %v584 = vpop.f32.mrb[0].mxu0
  %585 = vmatprep.mubr.f32.mxu0 0.0
  %586 = vmatmul.mubr.f32.gmra.mrb[0].mxu0 %v232
  %v587 = vpop.f32.mrb[0].mxu0
  %v588 = vadd.f32 %v87, %v587
  %v589 = vpop.f32.mrb[0].mxu0
  %590 = vmatprep.mubr.f32.mxu0 0.0
  %591 = vmatmul.mubr.f32.gmra.mrb[0].mxu0 %v235
  %v592 = vpop.f32.mrb[0].mxu0
  %v593 = vadd.f32 %v87, %v592
  %v594 = vpop.f32.mrb[0].mxu0
  %595 = vmatprep.mubr.f32.mxu0 0.0
  %596 = vmatmul.mubr.f32.gmra.mrb[0].mxu0 %v238
  %v597 = vpop.f32.mrb[0].mxu0
  %v598 = vadd.f32 %v87, %v597
  %v599 = vpop.f32.mrb[0].mxu0
  %600 = vmatprep.mubr.f32.mxu0 0.0
  %601 = vmatmul.mubr.f32.gmra.mrb[0].mxu0 %v241
  %v602 = vpop.f32.mrb[0].mxu0
  %v603 = vadd.f32 %v87, %v602
  %v604 = vpop.f32.mrb[0].mxu0
  %605 = vmatprep.mubr.f32.mxu0 0.0
  %606 = vmatmul.mubr.f32.gmra.mrb[0].mxu0 %v244
  %v607 = vpop.f32.mrb[0].mxu0
  %v608 = vadd.f32 %v87, %v607
  %v609 = vpop.f32.mrb[0].mxu0
  %610 = vmatprep.mubr.f32.mxu0 0.0
  %611 = vmatmul.mubr.f32.gmra.mrb[0].mxu0 %v247
  %v612 = vpop.f32.mrb[0].mxu0
  %v613 = vadd.f32 %v87, %v612
  %v614 = vpop.f32.mrb[0].mxu0
  %615 = vmatprep.mubr.f32.mxu0 0.0
  %616 = vmatmul.mubr.f32.gmra.mrb[0].mxu0 %v250
  %v617 = vpop.f32.mrb[0].mxu0
  %v618 = vadd.f32 %v87, %v617
  %v619 = vpop.f32.mrb[0].mxu0
  %620 = vmatprep.mubr.f32.mxu0 0.0
  %621 = vmatmul.mubr.f32.gmra.mrb[0].mxu0 %v253
  %v622 = vpop.f32.mrb[0].mxu0
  %v623 = vadd.f32 %v87, %v622
  %v624 = vpop.f32.mrb[0].mxu0
  %625 = vmatprep.mubr.f32.mxu0 0.0
  %626 = vmatmul.mubr.f32.gmra.mrb[0].mxu0 %v256
  %v627 = vpop.f32.mrb[0].mxu0
  %v628 = vadd.f32 %v87, %v627
  %v629 = vpop.f32.mrb[0].mxu0
  %630 = vmatprep.mubr.f32.mxu0 0.0
  %631 = vmatmul.mubr.f32.gmra.mrb[0].mxu0 %v259
  %v632 = vpop.f32.mrb[0].mxu0
  %v633 = vadd.f32 %v87, %v632
  %v634 = vpop.f32.mrb[0].mxu0
  %635 = vmatprep.mubr.f32.mxu0 0.0
  %636 = vmatmul.mubr.f32.gmra.mrb[0].mxu0 %v262
  %v637 = vpop.f32.mrb[0].mxu0
  %v638 = vadd.f32 %v87, %v637
  %v639 = vpop.f32.mrb[0].mxu0
  %640 = vmatprep.mubr.f32.mxu0 0.0
  %641 = vmatmul.mubr.f32.gmra.mrb[0].mxu0 %v265
  %v642 = vpop.f32.mrb[0].mxu0
  %v643 = vadd.f32 %v87, %v642
  %v644 = vpop.f32.mrb[0].mxu0
  %645 = vmatprep.mubr.f32.mxu0 0.0
  %646 = vmatmul.mubr.f32.gmra.mrb[0].mxu0 %v268
  %v647 = vpop.f32.mrb[0].mxu0
  %v648 = vadd.f32 %v87, %v647
  %v649 = vpop.f32.mrb[0].mxu0
  %650 = vmatprep.mubr.f32.mxu0 0.0
  %651 = vmatmul.mubr.f32.gmra.mrb[0].mxu0 %v271
  %v652 = vpop.f32.mrb[0].mxu0
  %v653 = vadd.f32 %v87, %v652
  %v654 = vpop.f32.mrb[0].mxu0
  %655 = vmatprep.mubr.f32.mxu0 0.0
  %656 = vmatmul.mubr.f32.gmra.mrb[0].mxu0 %v274
  %v657 = vpop.f32.mrb[0].mxu0
  %v658 = vadd.f32 %v87, %v657
  %v659 = vpop.f32.mrb[0].mxu0
  %660 = vmatprep.mubr.f32.mxu0 0.0
  %661 = vmatmul.mubr.f32.gmra.mrb[0].mxu0 %v277
  %v662 = vpop.f32.mrb[0].mxu0
  %v663 = vadd.f32 %v87, %v662
  %v664 = vpop.f32.mrb[0].mxu0
  %665 = vmatprep.mubr.f32.mxu0 0.0
  %666 = vmatmul.mubr.f32.gmra.mrb[0].mxu0 %v280
  %v667 = vpop.f32.mrb[0].mxu0
  %v668 = vadd.f32 %v87, %v667
  %v669 = vpop.f32.mrb[0].mxu0
  %670 = vdwg.mxu0
  %vm671 = vcmask 130048
  %v672 = vsel %vm671, %v353, 0.0
  %v673 = vsel %vm671, %v358, 0.0
  %v674 = vadd.f32 %v672, %v673
  %v675 = vsel %vm671, %v363, 0.0
  %v676 = vadd.f32 %v674, %v675
  %v677 = vsel %vm671, %v368, 0.0
  %v678 = vadd.f32 %v676, %v677
  %v679 = vsel %vm671, %v373, 0.0
  %v680 = vadd.f32 %v678, %v679
  %v681 = vsel %vm671, %v378, 0.0
  %v682 = vadd.f32 %v680, %v681
  %v683 = vsel %vm671, %v383, 0.0
  %v684 = vadd.f32 %v682, %v683
  %v685 = vsel %vm671, %v388, 0.0
  %v686 = vadd.f32 %v684, %v685
  %v687 = vsel %vm671, %v393, 0.0
  %v688 = vadd.f32 %v686, %v687
  %v689 = vsel %vm671, %v398, 0.0
  %v690 = vadd.f32 %v688, %v689
  %v691 = vsel %vm671, %v403, 0.0
  %v692 = vadd.f32 %v690, %v691
  %v693 = vsel %vm671, %v408, 0.0
  %v694 = vadd.f32 %v692, %v693
  %v695 = vsel %vm671, %v413, 0.0
  %v696 = vadd.f32 %v694, %v695
  %v697 = vsel %vm671, %v418, 0.0
  %v698 = vadd.f32 %v696, %v697
  %v699 = vsel %vm671, %v423, 0.0
  %v700 = vadd.f32 %v698, %v699
  %v701 = vsel %vm671, %v428, 0.0
  %v702 = vadd.f32 %v700, %v701
  %v703 = vsel %vm671, %v433, 0.0
  %v704 = vadd.f32 %v702, %v703
  %v705 = vsel %vm671, %v438, 0.0
  %v706 = vadd.f32 %v704, %v705
  %v707 = vsel %vm671, %v443, 0.0
  %v708 = vadd.f32 %v706, %v707
  %v709 = vsel %vm671, %v448, 0.0
  %v710 = vadd.f32 %v708, %v709
  %v711 = vsel %vm671, %v453, 0.0
  %v712 = vadd.f32 %v710, %v711
  %v713 = vsel %vm671, %v458, 0.0
  %v714 = vadd.f32 %v712, %v713
  %v715 = vsel %vm671, %v463, 0.0
  %v716 = vadd.f32 %v714, %v715
  %v717 = vsel %vm671, %v468, 0.0
  %v718 = vadd.f32 %v716, %v717
  %v719 = vsel %vm671, %v473, 0.0
  %v720 = vadd.f32 %v718, %v719
  %v721 = vsel %vm671, %v478, 0.0
  %v722 = vadd.f32 %v720, %v721
  %v723 = vsel %vm671, %v483, 0.0
  %v724 = vadd.f32 %v722, %v723
  %v725 = vsel %vm671, %v488, 0.0
  %v726 = vadd.f32 %v724, %v725
  %v727 = vsel %vm671, %v493, 0.0
  %v728 = vadd.f32 %v726, %v727
  %v729 = vsel %vm671, %v498, 0.0
  %v730 = vadd.f32 %v728, %v729
  %v731 = vsel %vm671, %v503, 0.0
  %v732 = vadd.f32 %v730, %v731
  %v733 = vsel %vm671, %v508, 0.0
  %v734 = vadd.f32 %v732, %v733
  %v735 = vsel %vm671, %v513, 0.0
  %v736 = vadd.f32 %v734, %v735
  %v737 = vsel %vm671, %v518, 0.0
  %v738 = vadd.f32 %v736, %v737
  %v739 = vsel %vm671, %v523, 0.0
  %v740 = vadd.f32 %v738, %v739
  %v741 = vsel %vm671, %v528, 0.0
  %v742 = vadd.f32 %v740, %v741
  %v743 = vsel %vm671, %v533, 0.0
  %v744 = vadd.f32 %v742, %v743
  %v745 = vsel %vm671, %v538, 0.0
  %v746 = vadd.f32 %v744, %v745
  %v747 = vsel %vm671, %v543, 0.0
  %v748 = vadd.f32 %v746, %v747
  %v749 = vsel %vm671, %v548, 0.0
  %v750 = vadd.f32 %v748, %v749
  %v751 = vsel %vm671, %v553, 0.0
  %v752 = vadd.f32 %v750, %v751
  %v753 = vsel %vm671, %v558, 0.0
  %v754 = vadd.f32 %v752, %v753
  %v755 = vsel %vm671, %v563, 0.0
  %v756 = vadd.f32 %v754, %v755
  %v757 = vsel %vm671, %v568, 0.0
  %v758 = vadd.f32 %v756, %v757
  %v759 = vsel %vm671, %v573, 0.0
  %v760 = vadd.f32 %v758, %v759
  %v761 = vsel %vm671, %v578, 0.0
  %v762 = vadd.f32 %v760, %v761
  %v763 = vsel %vm671, %v583, 0.0
  %v764 = vadd.f32 %v762, %v763
  %v765 = vsel %vm671, %v588, 0.0
  %v766 = vadd.f32 %v764, %v765
  %v767 = vsel %vm671, %v593, 0.0
  %v768 = vadd.f32 %v766, %v767
  %v769 = vsel %vm671, %v598, 0.0
  %v770 = vadd.f32 %v768, %v769
  %v771 = vsel %vm671, %v603, 0.0
  %v772 = vadd.f32 %v770, %v771
  %v773 = vsel %vm671, %v608, 0.0
  %v774 = vadd.f32 %v772, %v773
  %v775 = vsel %vm671, %v613, 0.0
  %v776 = vadd.f32 %v774, %v775
  %v777 = vsel %vm671, %v618, 0.0
  %v778 = vadd.f32 %v776, %v777
  %v779 = vsel %vm671, %v623, 0.0
  %v780 = vadd.f32 %v778, %v779
  %v781 = vsel %vm671, %v628, 0.0
  %v782 = vadd.f32 %v780, %v781
  %v783 = vsel %vm671, %v633, 0.0
  %v784 = vadd.f32 %v782, %v783
  %v785 = vsel %vm671, %v638, 0.0
  %v786 = vadd.f32 %v784, %v785
  %v787 = vsel %vm671, %v643, 0.0
  %v788 = vadd.f32 %v786, %v787
  %v789 = vsel %vm671, %v648, 0.0
  %v790 = vadd.f32 %v788, %v789
  %v791 = vsel %vm671, %v653, 0.0
  %v792 = vadd.f32 %v790, %v791
  %v793 = vsel %vm671, %v658, 0.0
  %v794 = vadd.f32 %v792, %v793
  %v795 = vsel %vm671, %v663, 0.0
  %v796 = vadd.f32 %v794, %v795
  %v797 = vsel %vm671, %v668, 0.0
  %v798 = vadd.f32 %v796, %v797
  %v799 = vrot.slane %v798, 4
  %v800 = vadd.f32 %v798, %v799
  %v801 = vrot.slane %v800, 2
  %v802 = vadd.f32 %v800, %v801
  %v803 = vrot.slane %v802, 1
  %v804 = vadd.f32 %v802, %v803
  %v805 = vrcp.pop 512.0
  %v806 = vmul.f32 %v804, %v805
  %v807 = vsub.f32 %v353, %v806
  %v808 = vsub.f32 %v358, %v806
  %v809 = vsub.f32 %v363, %v806
  %v810 = vsub.f32 %v368, %v806
  %v811 = vsub.f32 %v373, %v806
  %v812 = vsub.f32 %v378, %v806
  %v813 = vsub.f32 %v383, %v806
  %v814 = vsub.f32 %v388, %v806
  %v815 = vsub.f32 %v393, %v806
  %v816 = vsub.f32 %v398, %v806
  %v817 = vsub.f32 %v403, %v806
  %v818 = vsub.f32 %v408, %v806
  %v819 = vsub.f32 %v413, %v806
  %v820 = vsub.f32 %v418, %v806
  %v821 = vsub.f32 %v423, %v806
  %v822 = vsub.f32 %v428, %v806
  %v823 = vsub.f32 %v433, %v806
  %v824 = vsub.f32 %v438, %v806
  %v825 = vsub.f32 %v443, %v806
  %v826 = vsub.f32 %v448, %v806
  %v827 = vsub.f32 %v453, %v806
  %v828 = vsub.f32 %v458, %v806
  %v829 = vsub.f32 %v463, %v806
  %v830 = vsub.f32 %v468, %v806
  %v831 = vsub.f32 %v473, %v806
  %v832 = vsub.f32 %v478, %v806
  %v833 = vsub.f32 %v483, %v806
  %v834 = vsub.f32 %v488, %v806
  %v835 = vsub.f32 %v493, %v806
  %v836 = vsub.f32 %v498, %v806
  %v837 = vsub.f32 %v503, %v806
  %v838 = vsub.f32 %v508, %v806
  %v839 = vsub.f32 %v513, %v806
  %v840 = vsub.f32 %v518, %v806
  %v841 = vsub.f32 %v523, %v806
  %v842 = vsub.f32 %v528, %v806
  %v843 = vsub.f32 %v533, %v806
  %v844 = vsub.f32 %v538, %v806
  %v845 = vsub.f32 %v543, %v806
  %v846 = vsub.f32 %v548, %v806
  %v847 = vsub.f32 %v553, %v806
  %v848 = vsub.f32 %v558, %v806
  %v849 = vsub.f32 %v563, %v806
  %v850 = vsub.f32 %v568, %v806
  %v851 = vsub.f32 %v573, %v806
  %v852 = vsub.f32 %v578, %v806
  %v853 = vsub.f32 %v583, %v806
  %v854 = vsub.f32 %v588, %v806
  %v855 = vsub.f32 %v593, %v806
  %v856 = vsub.f32 %v598, %v806
  %v857 = vsub.f32 %v603, %v806
  %v858 = vsub.f32 %v608, %v806
  %v859 = vsub.f32 %v613, %v806
  %v860 = vsub.f32 %v618, %v806
  %v861 = vsub.f32 %v623, %v806
  %v862 = vsub.f32 %v628, %v806
  %v863 = vsub.f32 %v633, %v806
  %v864 = vsub.f32 %v638, %v806
  %v865 = vsub.f32 %v643, %v806
  %v866 = vsub.f32 %v648, %v806
  %v867 = vsub.f32 %v653, %v806
  %v868 = vsub.f32 %v658, %v806
  %v869 = vsub.f32 %v663, %v806
  %v870 = vsub.f32 %v668, %v806
  %v871 = vmul.f32 %v807, %v807
  %v872 = vmul.f32 %v808, %v808
  %v873 = vmul.f32 %v809, %v809
  %v874 = vmul.f32 %v810, %v810
  %v875 = vmul.f32 %v811, %v811
  %v876 = vmul.f32 %v812, %v812
  %v877 = vmul.f32 %v813, %v813
  %v878 = vmul.f32 %v814, %v814
  %v879 = vmul.f32 %v815, %v815
  %v880 = vmul.f32 %v816, %v816
  %v881 = vmul.f32 %v817, %v817
  %v882 = vmul.f32 %v818, %v818
  %v883 = vmul.f32 %v819, %v819
  %v884 = vmul.f32 %v820, %v820
  %v885 = vmul.f32 %v821, %v821
  %v886 = vmul.f32 %v822, %v822
  %v887 = vmul.f32 %v823, %v823
  %v888 = vmul.f32 %v824, %v824
  %v889 = vmul.f32 %v825, %v825
  %v890 = vmul.f32 %v826, %v826
  %v891 = vmul.f32 %v827, %v827
  %v892 = vmul.f32 %v828, %v828
  %v893 = vmul.f32 %v829, %v829
  %v894 = vmul.f32 %v830, %v830
  %v895 = vmul.f32 %v831, %v831
  %v896 = vmul.f32 %v832, %v832
  %v897 = vmul.f32 %v833, %v833
  %v898 = vmul.f32 %v834, %v834
  %v899 = vmul.f32 %v835, %v835
  %v900 = vmul.f32 %v836, %v836
  %v901 = vmul.f32 %v837, %v837
  %v902 = vmul.f32 %v838, %v838
  %v903 = vmul.f32 %v839, %v839
  %v904 = vmul.f32 %v840, %v840
  %v905 = vmul.f32 %v841, %v841
  %v906 = vmul.f32 %v842, %v842
  %v907 = vmul.f32 %v843, %v843
  %v908 = vmul.f32 %v844, %v844
  %v909 = vmul.f32 %v845, %v845
  %v910 = vmul.f32 %v846, %v846
  %v911 = vmul.f32 %v847, %v847
  %v912 = vmul.f32 %v848, %v848
  %v913 = vmul.f32 %v849, %v849
  %v914 = vmul.f32 %v850, %v850
  %v915 = vmul.f32 %v851, %v851
  %v916 = vmul.f32 %v852, %v852
  %v917 = vmul.f32 %v853, %v853
  %v918 = vmul.f32 %v854, %v854
  %v919 = vmul.f32 %v855, %v855
  %v920 = vmul.f32 %v856, %v856
  %v921 = vmul.f32 %v857, %v857
  %v922 = vmul.f32 %v858, %v858
  %v923 = vmul.f32 %v859, %v859
  %v924 = vmul.f32 %v860, %v860
  %v925 = vmul.f32 %v861, %v861
  %v926 = vmul.f32 %v862, %v862
  %v927 = vmul.f32 %v863, %v863
  %v928 = vmul.f32 %v864, %v864
  %v929 = vmul.f32 %v865, %v865
  %v930 = vmul.f32 %v866, %v866
  %v931 = vmul.f32 %v867, %v867
  %v932 = vmul.f32 %v868, %v868
  %v933 = vmul.f32 %v869, %v869
  %v934 = vmul.f32 %v870, %v870
  %v935 = vsel %vm671, %v871, 0.0
  %v936 = vsel %vm671, %v872, 0.0
  %v937 = vadd.f32 %v935, %v936
  %v938 = vsel %vm671, %v873, 0.0
  %v939 = vadd.f32 %v937, %v938
  %v940 = vsel %vm671, %v874, 0.0
  %v941 = vadd.f32 %v939, %v940
  %v942 = vsel %vm671, %v875, 0.0
  %v943 = vadd.f32 %v941, %v942
  %v944 = vsel %vm671, %v876, 0.0
  %v945 = vadd.f32 %v943, %v944
  %v946 = vsel %vm671, %v877, 0.0
  %v947 = vadd.f32 %v945, %v946
  %v948 = vsel %vm671, %v878, 0.0
  %v949 = vadd.f32 %v947, %v948
  %v950 = vsel %vm671, %v879, 0.0
  %v951 = vadd.f32 %v949, %v950
  %v952 = vsel %vm671, %v880, 0.0
  %v953 = vadd.f32 %v951, %v952
  %v954 = vsel %vm671, %v881, 0.0
  %v955 = vadd.f32 %v953, %v954
  %v956 = vsel %vm671, %v882, 0.0
  %v957 = vadd.f32 %v955, %v956
  %v958 = vsel %vm671, %v883, 0.0
  %v959 = vadd.f32 %v957, %v958
  %v960 = vsel %vm671, %v884, 0.0
  %v961 = vadd.f32 %v959, %v960
  %v962 = vsel %vm671, %v885, 0.0
  %v963 = vadd.f32 %v961, %v962
  %v964 = vsel %vm671, %v886, 0.0
  %v965 = vadd.f32 %v963, %v964
  %v966 = vsel %vm671, %v887, 0.0
  %v967 = vadd.f32 %v965, %v966
  %v968 = vsel %vm671, %v888, 0.0
  %v969 = vadd.f32 %v967, %v968
  %v970 = vsel %vm671, %v889, 0.0
  %v971 = vadd.f32 %v969, %v970
  %v972 = vsel %vm671, %v890, 0.0
  %v973 = vadd.f32 %v971, %v972
  %v974 = vsel %vm671, %v891, 0.0
  %v975 = vadd.f32 %v973, %v974
  %v976 = vsel %vm671, %v892, 0.0
  %v977 = vadd.f32 %v975, %v976
  %v978 = vsel %vm671, %v893, 0.0
  %v979 = vadd.f32 %v977, %v978
  %v980 = vsel %vm671, %v894, 0.0
  %v981 = vadd.f32 %v979, %v980
  %v982 = vsel %vm671, %v895, 0.0
  %v983 = vadd.f32 %v981, %v982
  %v984 = vsel %vm671, %v896, 0.0
  %v985 = vadd.f32 %v983, %v984
  %v986 = vsel %vm671, %v897, 0.0
  %v987 = vadd.f32 %v985, %v986
  %v988 = vsel %vm671, %v898, 0.0
  %v989 = vadd.f32 %v987, %v988
  %v990 = vsel %vm671, %v899, 0.0
  %v991 = vadd.f32 %v989, %v990
  %v992 = vsel %vm671, %v900, 0.0
  %v993 = vadd.f32 %v991, %v992
  %v994 = vsel %vm671, %v901, 0.0
  %v995 = vadd.f32 %v993, %v994
  %v996 = vsel %vm671, %v902, 0.0
  %v997 = vadd.f32 %v995, %v996
  %v998 = vsel %vm671, %v903, 0.0
  %v999 = vadd.f32 %v997, %v998
  %v1000 = vsel %vm671, %v904, 0.0
  %v1001 = vadd.f32 %v999, %v1000
  %v1002 = vsel %vm671, %v905, 0.0
  %v1003 = vadd.f32 %v1001, %v1002
  %v1004 = vsel %vm671, %v906, 0.0
  %v1005 = vadd.f32 %v1003, %v1004
  %v1006 = vsel %vm671, %v907, 0.0
  %v1007 = vadd.f32 %v1005, %v1006
  %v1008 = vsel %vm671, %v908, 0.0
  %v1009 = vadd.f32 %v1007, %v1008
  %v1010 = vsel %vm671, %v909, 0.0
  %v1011 = vadd.f32 %v1009, %v1010
  %v1012 = vsel %vm671, %v910, 0.0
  %v1013 = vadd.f32 %v1011, %v1012
  %v1014 = vsel %vm671, %v911, 0.0
  %v1015 = vadd.f32 %v1013, %v1014
  %v1016 = vsel %vm671, %v912, 0.0
  %v1017 = vadd.f32 %v1015, %v1016
  %v1018 = vsel %vm671, %v913, 0.0
  %v1019 = vadd.f32 %v1017, %v1018
  %v1020 = vsel %vm671, %v914, 0.0
  %v1021 = vadd.f32 %v1019, %v1020
  %v1022 = vsel %vm671, %v915, 0.0
  %v1023 = vadd.f32 %v1021, %v1022
  %v1024 = vsel %vm671, %v916, 0.0
  %v1025 = vadd.f32 %v1023, %v1024
  %v1026 = vsel %vm671, %v917, 0.0
  %v1027 = vadd.f32 %v1025, %v1026
  %v1028 = vsel %vm671, %v918, 0.0
  %v1029 = vadd.f32 %v1027, %v1028
  %v1030 = vsel %vm671, %v919, 0.0
  %v1031 = vadd.f32 %v1029, %v1030
  %v1032 = vsel %vm671, %v920, 0.0
  %v1033 = vadd.f32 %v1031, %v1032
  %v1034 = vsel %vm671, %v921, 0.0
  %v1035 = vadd.f32 %v1033, %v1034
  %v1036 = vsel %vm671, %v922, 0.0
  %v1037 = vadd.f32 %v1035, %v1036
  %v1038 = vsel %vm671, %v923, 0.0
  %v1039 = vadd.f32 %v1037, %v1038
  %v1040 = vsel %vm671, %v924, 0.0
  %v1041 = vadd.f32 %v1039, %v1040
  %v1042 = vsel %vm671, %v925, 0.0
  %v1043 = vadd.f32 %v1041, %v1042
  %v1044 = vsel %vm671, %v926, 0.0
  %v1045 = vadd.f32 %v1043, %v1044
  %v1046 = vsel %vm671, %v927, 0.0
  %v1047 = vadd.f32 %v1045, %v1046
  %v1048 = vsel %vm671, %v928, 0.0
  %v1049 = vadd.f32 %v1047, %v1048
  %v1050 = vsel %vm671, %v929, 0.0
  %v1051 = vadd.f32 %v1049, %v1050
  %v1052 = vsel %vm671, %v930, 0.0
  %v1053 = vadd.f32 %v1051, %v1052
  %v1054 = vsel %vm671, %v931, 0.0
  %v1055 = vadd.f32 %v1053, %v1054
  %v1056 = vsel %vm671, %v932, 0.0
  %v1057 = vadd.f32 %v1055, %v1056
  %v1058 = vsel %vm671, %v933, 0.0
  %v1059 = vadd.f32 %v1057, %v1058
  %v1060 = vsel %vm671, %v934, 0.0
  %v1061 = vadd.f32 %v1059, %v1060
  %v1062 = vrot.slane %v1061, 4
  %v1063 = vadd.f32 %v1061, %v1062
  %v1064 = vrot.slane %v1063, 2
  %v1065 = vadd.f32 %v1063, %v1064
  %v1066 = vrot.slane %v1065, 1
  %v1067 = vadd.f32 %v1065, %v1066
  %v1068 = vmul.f32 %v1067, %v805
  %v1069 = vadd.f32 %v1068, 1e-05
  %v1070 = vrsqrt.pop %v1069
  %v1071 = vmul.f32 %v807, %v1070
  %v1072 = vmul.f32 %v808, %v1070
  %v1073 = vmul.f32 %v809, %v1070
  %v1074 = vmul.f32 %v810, %v1070
  %v1075 = vmul.f32 %v811, %v1070
  %v1076 = vmul.f32 %v812, %v1070
  %v1077 = vmul.f32 %v813, %v1070
  %v1078 = vmul.f32 %v814, %v1070
  %v1079 = vmul.f32 %v815, %v1070
  %v1080 = vmul.f32 %v816, %v1070
  %v1081 = vmul.f32 %v817, %v1070
  %v1082 = vmul.f32 %v818, %v1070
  %v1083 = vmul.f32 %v819, %v1070
  %v1084 = vmul.f32 %v820, %v1070
  %v1085 = vmul.f32 %v821, %v1070
  %v1086 = vmul.f32 %v822, %v1070
  %v1087 = vmul.f32 %v823, %v1070
  %v1088 = vmul.f32 %v824, %v1070
  %v1089 = vmul.f32 %v825, %v1070
  %v1090 = vmul.f32 %v826, %v1070
  %v1091 = vmul.f32 %v827, %v1070
  %v1092 = vmul.f32 %v828, %v1070
  %v1093 = vmul.f32 %v829, %v1070
  %v1094 = vmul.f32 %v830, %v1070
  %v1095 = vmul.f32 %v831, %v1070
  %v1096 = vmul.f32 %v832, %v1070
  %v1097 = vmul.f32 %v833, %v1070
  %v1098 = vmul.f32 %v834, %v1070
  %v1099 = vmul.f32 %v835, %v1070
  %v1100 = vmul.f32 %v836, %v1070
  %v1101 = vmul.f32 %v837, %v1070
  %v1102 = vmul.f32 %v838, %v1070
  %v1103 = vmul.f32 %v839, %v1070
  %v1104 = vmul.f32 %v840, %v1070
  %v1105 = vmul.f32 %v841, %v1070
  %v1106 = vmul.f32 %v842, %v1070
  %v1107 = vmul.f32 %v843, %v1070
  %v1108 = vmul.f32 %v844, %v1070
  %v1109 = vmul.f32 %v845, %v1070
  %v1110 = vmul.f32 %v846, %v1070
  %v1111 = vmul.f32 %v847, %v1070
  %v1112 = vmul.f32 %v848, %v1070
  %v1113 = vmul.f32 %v849, %v1070
  %v1114 = vmul.f32 %v850, %v1070
  %v1115 = vmul.f32 %v851, %v1070
  %v1116 = vmul.f32 %v852, %v1070
  %v1117 = vmul.f32 %v853, %v1070
  %v1118 = vmul.f32 %v854, %v1070
  %v1119 = vmul.f32 %v855, %v1070
  %v1120 = vmul.f32 %v856, %v1070
  %v1121 = vmul.f32 %v857, %v1070
  %v1122 = vmul.f32 %v858, %v1070
  %v1123 = vmul.f32 %v859, %v1070
  %v1124 = vmul.f32 %v860, %v1070
  %v1125 = vmul.f32 %v861, %v1070
  %v1126 = vmul.f32 %v862, %v1070
  %v1127 = vmul.f32 %v863, %v1070
  %v1128 = vmul.f32 %v864, %v1070
  %v1129 = vmul.f32 %v865, %v1070
  %v1130 = vmul.f32 %v866, %v1070
  %v1131 = vmul.f32 %v867, %v1070
  %v1132 = vmul.f32 %v868, %v1070
  %v1133 = vmul.f32 %v869, %v1070
  %v1134 = vmul.f32 %v870, %v1070
  %v1135 = vmax.f32 %v1071, 0.0
  %v1136 = vmax.f32 %v1072, 0.0
  %v1137 = vmax.f32 %v1073, 0.0
  %v1138 = vmax.f32 %v1074, 0.0
  %v1139 = vmax.f32 %v1075, 0.0
  %v1140 = vmax.f32 %v1076, 0.0
  %v1141 = vmax.f32 %v1077, 0.0
  %v1142 = vmax.f32 %v1078, 0.0
  %v1143 = vmax.f32 %v1079, 0.0
  %v1144 = vmax.f32 %v1080, 0.0
  %v1145 = vmax.f32 %v1081, 0.0
  %v1146 = vmax.f32 %v1082, 0.0
  %v1147 = vmax.f32 %v1083, 0.0
  %v1148 = vmax.f32 %v1084, 0.0
  %v1149 = vmax.f32 %v1085, 0.0
  %v1150 = vmax.f32 %v1086, 0.0
  %v1151 = vmax.f32 %v1087, 0.0
  %v1152 = vmax.f32 %v1088, 0.0
  %v1153 = vmax.f32 %v1089, 0.0
  %v1154 = vmax.f32 %v1090, 0.0
  %v1155 = vmax.f32 %v1091, 0.0
  %v1156 = vmax.f32 %v1092, 0.0
  %v1157 = vmax.f32 %v1093, 0.0
  %v1158 = vmax.f32 %v1094, 0.0
  %v1159 = vmax.f32 %v1095, 0.0
  %v1160 = vmax.f32 %v1096, 0.0
  %v1161 = vmax.f32 %v1097, 0.0
  %v1162 = vmax.f32 %v1098, 0.0
  %v1163 = vmax.f32 %v1099, 0.0
  %v1164 = vmax.f32 %v1100, 0.0
  %v1165 = vmax.f32 %v1101, 0.0
  %v1166 = vmax.f32 %v1102, 0.0
  %v1167 = vmax.f32 %v1103, 0.0
  %v1168 = vmax.f32 %v1104, 0.0
  %v1169 = vmax.f32 %v1105, 0.0
  %v1170 = vmax.f32 %v1106, 0.0
  %v1171 = vmax.f32 %v1107, 0.0
  %v1172 = vmax.f32 %v1108, 0.0
  %v1173 = vmax.f32 %v1109, 0.0
  %v1174 = vmax.f32 %v1110, 0.0
  %v1175 = vmax.f32 %v1111, 0.0
  %v1176 = vmax.f32 %v1112, 0.0
  %v1177 = vmax.f32 %v1113, 0.0
  %v1178 = vmax.f32 %v1114, 0.0
  %v1179 = vmax.f32 %v1115, 0.0
  %v1180 = vmax.f32 %v1116, 0.0
  %v1181 = vmax.f32 %v1117, 0.0
  %v1182 = vmax.f32 %v1118, 0.0
  %v1183 = vmax.f32 %v1119, 0.0
  %v1184 = vmax.f32 %v1120, 0.0
  %v1185 = vmax.f32 %v1121, 0.0
  %v1186 = vmax.f32 %v1122, 0.0
  %v1187 = vmax.f32 %v1123, 0.0
  %v1188 = vmax.f32 %v1124, 0.0
  %v1189 = vmax.f32 %v1125, 0.0
  %v1190 = vmax.f32 %v1126, 0.0
  %v1191 = vmax.f32 %v1127, 0.0
  %v1192 = vmax.f32 %v1128, 0.0
  %v1193 = vmax.f32 %v1129, 0.0
  %v1194 = vmax.f32 %v1130, 0.0
  %v1195 = vmax.f32 %v1131, 0.0
  %v1196 = vmax.f32 %v1132, 0.0
  %v1197 = vmax.f32 %v1133, 0.0
  %v1198 = vmax.f32 %v1134, 0.0
  %1199 = vst.msk [vmem:[%s3] sm:$0xff] %vm671, %v1135
  %1200 = vst.msk [vmem:[%s3 + $0x8] sm:$0xff] %vm671, %v1136
  %1201 = vst.msk [vmem:[%s3 + $0x10] sm:$0xff] %vm671, %v1137
  %1202 = vst.msk [vmem:[%s3 + $0x18] sm:$0xff] %vm671, %v1138
  %1203 = vst.msk [vmem:[%s3 + $0x20] sm:$0xff] %vm671, %v1139
  %1204 = vst.msk [vmem:[%s3 + $0x28] sm:$0xff] %vm671, %v1140
  %1205 = vst.msk [vmem:[%s3 + $0x30] sm:$0xff] %vm671, %v1141
  %1206 = vst.msk [vmem:[%s3 + $0x38] sm:$0xff] %vm671, %v1142
  %1207 = vst.msk [vmem:[%s3 + $0x40] sm:$0xff] %vm671, %v1143
  %1208 = vst.msk [vmem:[%s3 + $0x48] sm:$0xff] %vm671, %v1144
  %1209 = vst.msk [vmem:[%s3 + $0x50] sm:$0xff] %vm671, %v1145
  %1210 = vst.msk [vmem:[%s3 + $0x58] sm:$0xff] %vm671, %v1146
  %1211 = vst.msk [vmem:[%s3 + $0x60] sm:$0xff] %vm671, %v1147
  %1212 = vst.msk [vmem:[%s3 + $0x68] sm:$0xff] %vm671, %v1148
  %1213 = vst.msk [vmem:[%s3 + $0x70] sm:$0xff] %vm671, %v1149
  %1214 = vst.msk [vmem:[%s3 + $0x78] sm:$0xff] %vm671, %v1150
  %1215 = vst.msk [vmem:[%s3 + $0x80] sm:$0xff] %vm671, %v1151
  %1216 = vst.msk [vmem:[%s3 + $0x88] sm:$0xff] %vm671, %v1152
  %1217 = vst.msk [vmem:[%s3 + $0x90] sm:$0xff] %vm671, %v1153
  %1218 = vst.msk [vmem:[%s3 + $0x98] sm:$0xff] %vm671, %v1154
  %1219 = vst.msk [vmem:[%s3 + $0xa0] sm:$0xff] %vm671, %v1155
  %1220 = vst.msk [vmem:[%s3 + $0xa8] sm:$0xff] %vm671, %v1156
  %1221 = vst.msk [vmem:[%s3 + $0xb0] sm:$0xff] %vm671, %v1157
  %1222 = vst.msk [vmem:[%s3 + $0xb8] sm:$0xff] %vm671, %v1158
  %1223 = vst.msk [vmem:[%s3 + $0xc0] sm:$0xff] %vm671, %v1159
  %1224 = vst.msk [vmem:[%s3 + $0xc8] sm:$0xff] %vm671, %v1160
  %1225 = vst.msk [vmem:[%s3 + $0xd0] sm:$0xff] %vm671, %v1161
  %1226 = vst.msk [vmem:[%s3 + $0xd8] sm:$0xff] %vm671, %v1162
  %1227 = vst.msk [vmem:[%s3 + $0xe0] sm:$0xff] %vm671, %v1163
  %1228 = vst.msk [vmem:[%s3 + $0xe8] sm:$0xff] %vm671, %v1164
  %1229 = vst.msk [vmem:[%s3 + $0xf0] sm:$0xff] %vm671, %v1165
  %1230 = vst.msk [vmem:[%s3 + $0xf8] sm:$0xff] %vm671, %v1166
  %1231 = vst.msk [vmem:[%s3 + $0x100] sm:$0xff] %vm671, %v1167
  %1232 = vst.msk [vmem:[%s3 + $0x108] sm:$0xff] %vm671, %v1168
  %1233 = vst.msk [vmem:[%s3 + $0x110] sm:$0xff] %vm671, %v1169
  %1234 = vst.msk [vmem:[%s3 + $0x118] sm:$0xff] %vm671, %v1170
  %1235 = vst.msk [vmem:[%s3 + $0x120] sm:$0xff] %vm671, %v1171
  %1236 = vst.msk [vmem:[%s3 + $0x128] sm:$0xff] %vm671, %v1172
  %1237 = vst.msk [vmem:[%s3 + $0x130] sm:$0xff] %vm671, %v1173
  %1238 = vst.msk [vmem:[%s3 + $0x138] sm:$0xff] %vm671, %v1174
  %1239 = vst.msk [vmem:[%s3 + $0x140] sm:$0xff] %vm671, %v1175
  %1240 = vst.msk [vmem:[%s3 + $0x148] sm:$0xff] %vm671, %v1176
  %1241 = vst.msk [vmem:[%s3 + $0x150] sm:$0xff] %vm671, %v1177
  %1242 = vst.msk [vmem:[%s3 + $0x158] sm:$0xff] %vm671, %v1178
  %1243 = vst.msk [vmem:[%s3 + $0x160] sm:$0xff] %vm671, %v1179
  %1244 = vst.msk [vmem:[%s3 + $0x168] sm:$0xff] %vm671, %v1180
  %1245 = vst.msk [vmem:[%s3 + $0x170] sm:$0xff] %vm671, %v1181
  %1246 = vst.msk [vmem:[%s3 + $0x178] sm:$0xff] %vm671, %v1182
  %1247 = vst.msk [vmem:[%s3 + $0x180] sm:$0xff] %vm671, %v1183
  %1248 = vst.msk [vmem:[%s3 + $0x188] sm:$0xff] %vm671, %v1184
  %1249 = vst.msk [vmem:[%s3 + $0x190] sm:$0xff] %vm671, %v1185
  %1250 = vst.msk [vmem:[%s3 + $0x198] sm:$0xff] %vm671, %v1186
  %1251 = vst.msk [vmem:[%s3 + $0x1a0] sm:$0xff] %vm671, %v1187
  %1252 = vst.msk [vmem:[%s3 + $0x1a8] sm:$0xff] %vm671, %v1188
  %1253 = vst.msk [vmem:[%s3 + $0x1b0] sm:$0xff] %vm671, %v1189
  %1254 = vst.msk [vmem:[%s3 + $0x1b8] sm:$0xff] %vm671, %v1190
  %1255 = vst.msk [vmem:[%s3 + $0x1c0] sm:$0xff] %vm671, %v1191
  %1256 = vst.msk [vmem:[%s3 + $0x1c8] sm:$0xff] %vm671, %v1192
  %1257 = vst.msk [vmem:[%s3 + $0x1d0] sm:$0xff] %vm671, %v1193
  %1258 = vst.msk [vmem:[%s3 + $0x1d8] sm:$0xff] %vm671, %v1194
  %1259 = vst.msk [vmem:[%s3 + $0x1e0] sm:$0xff] %vm671, %v1195
  %1260 = vst.msk [vmem:[%s3 + $0x1e8] sm:$0xff] %vm671, %v1196
  %1261 = vst.msk [vmem:[%s3 + $0x1f0] sm:$0xff] %vm671, %v1197
  %1262 = vst.msk [vmem:[%s3 + $0x1f8] sm:$0xff] %vm671, %v1198
  // Predicated region
  $region14: #{net_forward.5} parent=0 // pred_check
    _
  $region15: #{net_forward.5} parent=0 // pred_check_branch
    %1264 = sbr.rel (0) target = $region17
  $region16: #{net_forward.5} parent=0 // pred_region
    _
  $region17: #{net_forward.5} parent=0 // pred_fallthru
    _
  // Predicated region
  $region18: #{net_forward.5} parent=0 // pred_check
    _
  $region19: #{net_forward.5} parent=0 // pred_check_branch
    %1266 = sbr.rel (0) target = $region21
  $region20: #{net_forward.5} parent=0 // pred_region
    _
  $region21: #{net_forward.5} parent=0 // pred_fallthru
    _

// kernel: net_forward.6
$region0: #{net_forward.6}
  #allocation0 [shape = 'u32[]', space=smem, size = 0x4, offset = 0x4, fixed_abs, tag = 'smem constant byte address 0x4 - core index']
  #allocation1 [shape = 'u32[144,128]{1,0:T(1,128)}', space=vmem, size = 0x12000, scoped, tag = 'internal scratch']
  %s0 = inlined_call_operand.vmem [shape: f32[128,144], index: 0, kind: input, shape index: {}]
  %s1 = inlined_call_operand.vmem [shape: f32[144,32], index: 1, kind: input, shape index: {}]
  %s2 = inlined_call_operand.vmem [shape: f32[1,32], index: 2, kind: input, shape index: {}]
  %s3 = inlined_call_operand.vmem [shape: f32[128,32], index: 3, kind: output, shape index: {}]
  %s4 = sld [smem:[#allocation0]]
  $region22: #{net_forward.6} parent=0
    _
  %s6 = ssub.s32 1, %s4
  %s7 = scalar_select 0, %s6, %s4
  // Predicated region
  $region2: #{net_forward.6} parent=0 // pred_check
    _
  $region3: #{net_forward.6} parent=0 // pred_check_branch
    %9 = sbr.rel (0) target = $region5
  $region4: #{net_forward.6} parent=0 // pred_region
    _
  $region5: #{net_forward.6} parent=0 // pred_fallthru
    _
  // Predicated region
  $region6: #{net_forward.6} parent=0 // pred_check
    _
  $region7: #{net_forward.6} parent=0 // pred_check_branch
    %11 = sbr.rel (0) target = $region9
  $region8: #{net_forward.6} parent=0 // pred_region
    _
  $region9: #{net_forward.6} parent=0 // pred_fallthru
    _
  // Predicated region
  $region10: #{net_forward.6} parent=0 // pred_check
    _
  $region11: #{net_forward.6} parent=0 // pred_check_branch
    %13 = sbr.rel (0) target = $region13
  $region12: #{net_forward.6} parent=0 // pred_region
    _
  $region13: #{net_forward.6} parent=0 // pred_fallthru
    _
  %v14 = vld [vmem:[%s0] sm:$0xff]
  %v15 = vld [vmem:[%s0 + $0x8] sm:$0xff]
  %v16 = vld [vmem:[%s0 + $0x10] sm:$0xff]
  %v17 = vld [vmem:[%s0 + $0x18] sm:$0xff]
  %v18 = vld [vmem:[%s0 + $0x20] sm:$0xff]
  %v19 = vld [vmem:[%s0 + $0x28] sm:$0xff]
  %v20 = vld [vmem:[%s0 + $0x30] sm:$0xff]
  %v21 = vld [vmem:[%s0 + $0x38] sm:$0xff]
  %v22 = vld [vmem:[%s0 + $0x40] sm:$0xff]
  %v23 = vld [vmem:[%s0 + $0x48] sm:$0xff]
  %v24 = vld [vmem:[%s0 + $0x50] sm:$0xff]
  %v25 = vld [vmem:[%s0 + $0x58] sm:$0xff]
  %v26 = vld [vmem:[%s0 + $0x60] sm:$0xff]
  %v27 = vld [vmem:[%s0 + $0x68] sm:$0xff]
  %v28 = vld [vmem:[%s0 + $0x70] sm:$0xff]
  %v29 = vld [vmem:[%s0 + $0x78] sm:$0xff]
  %v30 = vld [vmem:[%s0 + $0x80] sm:$0xff]
  %v31 = vld [vmem:[%s0 + $0x88] sm:$0xff]
  %v32 = vld [vmem:[%s0 + $0x90] sm:$0xff]
  %v33 = vld [vmem:[%s0 + $0x98] sm:$0xff]
  %v34 = vld [vmem:[%s0 + $0xa0] sm:$0xff]
  %v35 = vld [vmem:[%s0 + $0xa8] sm:$0xff]
  %v36 = vld [vmem:[%s0 + $0xb0] sm:$0xff]
  %v37 = vld [vmem:[%s0 + $0xb8] sm:$0xff]
  %v38 = vld [vmem:[%s0 + $0xc0] sm:$0xff]
  %v39 = vld [vmem:[%s0 + $0xc8] sm:$0xff]
  %v40 = vld [vmem:[%s0 + $0xd0] sm:$0xff]
  %v41 = vld [vmem:[%s0 + $0xd8] sm:$0xff]
  %v42 = vld [vmem:[%s0 + $0xe0] sm:$0xff]
  %v43 = vld [vmem:[%s0 + $0xe8] sm:$0xff]
  %v44 = vld [vmem:[%s0 + $0xf0] sm:$0xff]
  %v45 = vld [vmem:[%s0 + $0xf8] sm:$0xff]
  %v46 = vld [vmem:[%s1] sm:$0xff]
  %v47 = vld [vmem:[%s1 + $0x8] sm:$0xff]
  %v48 = vld [vmem:[%s1 + $0x10] sm:$0xff]
  %v49 = vld [vmem:[%s1 + $0x18] sm:$0xff]
  %v50 = vld [vmem:[%s1 + $0x20] sm:$0xff]
  %v51 = vld [vmem:[%s1 + $0x28] sm:$0xff]
  %v52 = vld [vmem:[%s1 + $0x30] sm:$0xff]
  %v53 = vld [vmem:[%s1 + $0x38] sm:$0xff]
  %v54 = vld [vmem:[%s1 + $0x40] sm:$0xff]
  %v55 = vld [vmem:[%s1 + $0x48] sm:$0xff]
  %v56 = vld [vmem:[%s1 + $0x50] sm:$0xff]
  %v57 = vld [vmem:[%s1 + $0x58] sm:$0xff]
  %v58 = vld [vmem:[%s1 + $0x60] sm:$0xff]
  %v59 = vld [vmem:[%s1 + $0x68] sm:$0xff]
  %v60 = vld [vmem:[%s1 + $0x70] sm:$0xff]
  %v61 = vld [vmem:[%s1 + $0x78] sm:$0xff]
  %v62 = vld [vmem:[%s1 + $0x80] sm:$0xff]
  %v63 = vld [vmem:[%s1 + $0x88] sm:$0xff]
  %v64 = vld [vmem:[%s2] sm:$0x1]
  %v66 = vlaneseq
  %v67 = vshrl.u32 %v66, 7
  %v68 = vsub.s32 0, %v67
  %v69 = vrot.slane %v64, %v68
  %vm71 = vcmask 130048
  %v73 = vsel %vm71, %v15, 0
  %v76 = vsel %vm71, %v17, 0
  %v79 = vsel %vm71, %v19, 0
  %v82 = vsel %vm71, %v21, 0
  %v85 = vsel %vm71, %v23, 0
  %v88 = vsel %vm71, %v25, 0
  %v91 = vsel %vm71, %v27, 0
  %v94 = vsel %vm71, %v29, 0
  %v97 = vsel %vm71, %v31, 0
  %v100 = vsel %vm71, %v33, 0
  %v103 = vsel %vm71, %v35, 0
  %v106 = vsel %vm71, %v37, 0
  %v109 = vsel %vm71, %v39, 0
  %v112 = vsel %vm71, %v41, 0
  %v115 = vsel %vm71, %v43, 0
  %v118 = vsel %vm71, %v45, 0
  %120 = vmatprep.subr.mxu0 0.0
  %121 = vmatpush1.msra.mxu0 %v46
  %122 = vmatprep.subr.mxu0 0.0
  %123 = vmatpush1.msra.mxu0 %v47
  %124 = vmatprep.subr.mxu0 0.0
  %125 = vmatpush1.msra.mxu0 %v48
  %126 = vmatprep.subr.mxu0 0.0
  %127 = vmatpush1.msra.mxu0 %v49
  %128 = vmatprep.subr.mxu0 0.0
  %129 = vmatpush1.msra.mxu0 %v50
  %130 = vmatprep.subr.mxu0 0.0
  %131 = vmatpush1.msra.mxu0 %v51
  %132 = vmatprep.subr.mxu0 0.0
  %133 = vmatpush1.msra.mxu0 %v52
  %134 = vmatprep.subr.mxu0 0.0
  %135 = vmatpush1.msra.mxu0 %v53
  %136 = vmatprep.subr.mxu0 0.0
  %137 = vmatpush1.msra.mxu0 %v54
  %138 = vmatprep.subr.mxu0 0.0
  %139 = vmatpush1.msra.mxu0 %v55
  %140 = vmatprep.subr.mxu0 0.0
  %141 = vmatpush1.msra.mxu0 %v56
  %142 = vmatprep.subr.mxu0 0.0
  %143 = vmatpush1.msra.mxu0 %v57
  %144 = vmatprep.subr.mxu0 0.0
  %145 = vmatpush1.msra.mxu0 %v58
  %146 = vmatprep.subr.mxu0 0.0
  %147 = vmatpush1.msra.mxu0 %v59
  %148 = vmatprep.subr.mxu0 0.0
  %149 = vmatpush1.msra.mxu0 %v60
  %150 = vmatprep.subr.mxu0 0.0
  %151 = vmatpush1.msra.mxu0 %v61
  %152 = vmatprep.subr.mxu0 0.0
  %153 = vmatpush1.msra.mxu0 %v62
  %154 = vmatprep.subr.mxu0 0.0
  %155 = vmatpush1.msra.mxu0 %v63
  %156 = vmatprep.subr.mxu0 0.0
  %157 = vmatpush1.msra.mxu0 0.0
  %158 = vmatprep.subr.mxu0 0.0
  %159 = vmatpush1.msra.mxu0 0.0
  %160 = vmatprep.subr.mxu0 0.0
  %161 = vmatpush1.msra.mxu0 0.0
  %162 = vmatprep.subr.mxu0 0.0
  %163 = vmatpush1.msra.mxu0 0.0
  %164 = vmatprep.subr.mxu0 0.0
  %165 = vmatpush1.msra.mxu0 0.0
  %166 = vmatprep.subr.mxu0 0.0
  %167 = vmatpush1.msra.mxu0 0.0
  %168 = vmatprep.subr.mxu0 0.0
  %169 = vmatpush1.msra.mxu0 0.0
  %170 = vmatprep.subr.mxu0 0.0
  %171 = vmatpush1.msra.mxu0 0.0
  %172 = vmatprep.subr.mxu0 0.0
  %173 = vmatpush1.msra.mxu0 0.0
  %174 = vmatprep.subr.mxu0 0.0
  %175 = vmatpush1.msra.mxu0 0.0
  %176 = vmatprep.subr.mxu0 0.0
  %177 = vmatpush1.msra.mxu0 0.0
  %178 = vmatprep.subr.mxu0 0.0
  %179 = vmatpush1.msra.mxu0 0.0
  %180 = vmatprep.subr.mxu0 0.0
  %181 = vmatpush1.msra.mxu0 0.0
  %182 = vmatprep.subr.mxu0 0.0
  %183 = vmatpush1.msra.mxu0 0.0
  %184 = vmatprep.mubr.f32.mxu0 %v73
  %185 = vmatmul.mubr.f32.gmra.mrb[0].mxu0 %v14
  %v186 = vpop.f32.mrb[0].mxu0
  %v187 = vadd.f32 %v69, %v186
  %v188 = vpop.f32.mrb[0].mxu0
  %189 = vmatprep.mubr.f32.mxu0 %v76
  %190 = vmatmul.mubr.f32.gmra.mrb[0].mxu0 %v16
  %v191 = vpop.f32.mrb[0].mxu0
  %v192 = vadd.f32 %v69, %v191
  %v193 = vpop.f32.mrb[0].mxu0
  %194 = vmatprep.mubr.f32.mxu0 %v79
  %195 = vmatmul.mubr.f32.gmra.mrb[0].mxu0 %v18
  %v196 = vpop.f32.mrb[0].mxu0
  %v197 = vadd.f32 %v69, %v196
  %v198 = vpop.f32.mrb[0].mxu0
  %199 = vmatprep.mubr.f32.mxu0 %v82
  %200 = vmatmul.mubr.f32.gmra.mrb[0].mxu0 %v20
  %v201 = vpop.f32.mrb[0].mxu0
  %v202 = vadd.f32 %v69, %v201
  %v203 = vpop.f32.mrb[0].mxu0
  %204 = vmatprep.mubr.f32.mxu0 %v85
  %205 = vmatmul.mubr.f32.gmra.mrb[0].mxu0 %v22
  %v206 = vpop.f32.mrb[0].mxu0
  %v207 = vadd.f32 %v69, %v206
  %v208 = vpop.f32.mrb[0].mxu0
  %209 = vmatprep.mubr.f32.mxu0 %v88
  %210 = vmatmul.mubr.f32.gmra.mrb[0].mxu0 %v24
  %v211 = vpop.f32.mrb[0].mxu0
  %v212 = vadd.f32 %v69, %v211
  %v213 = vpop.f32.mrb[0].mxu0
  %214 = vmatprep.mubr.f32.mxu0 %v91
  %215 = vmatmul.mubr.f32.gmra.mrb[0].mxu0 %v26
  %v216 = vpop.f32.mrb[0].mxu0
  %v217 = vadd.f32 %v69, %v216
  %v218 = vpop.f32.mrb[0].mxu0
  %219 = vmatprep.mubr.f32.mxu0 %v94
  %220 = vmatmul.mubr.f32.gmra.mrb[0].mxu0 %v28
  %v221 = vpop.f32.mrb[0].mxu0
  %v222 = vadd.f32 %v69, %v221
  %v223 = vpop.f32.mrb[0].mxu0
  %224 = vmatprep.mubr.f32.mxu0 %v97
  %225 = vmatmul.mubr.f32.gmra.mrb[0].mxu0 %v30
  %v226 = vpop.f32.mrb[0].mxu0
  %v227 = vadd.f32 %v69, %v226
  %v228 = vpop.f32.mrb[0].mxu0
  %229 = vmatprep.mubr.f32.mxu0 %v100
  %230 = vmatmul.mubr.f32.gmra.mrb[0].mxu0 %v32
  %v231 = vpop.f32.mrb[0].mxu0
  %v232 = vadd.f32 %v69, %v231
  %v233 = vpop.f32.mrb[0].mxu0
  %234 = vmatprep.mubr.f32.mxu0 %v103
  %235 = vmatmul.mubr.f32.gmra.mrb[0].mxu0 %v34
  %v236 = vpop.f32.mrb[0].mxu0
  %v237 = vadd.f32 %v69, %v236
  %v238 = vpop.f32.mrb[0].mxu0
  %239 = vmatprep.mubr.f32.mxu0 %v106
  %240 = vmatmul.mubr.f32.gmra.mrb[0].mxu0 %v36
  %v241 = vpop.f32.mrb[0].mxu0
  %v242 = vadd.f32 %v69, %v241
  %v243 = vpop.f32.mrb[0].mxu0
  %244 = vmatprep.mubr.f32.mxu0 %v109
  %245 = vmatmul.mubr.f32.gmra.mrb[0].mxu0 %v38
  %v246 = vpop.f32.mrb[0].mxu0
  %v247 = vadd.f32 %v69, %v246
  %v248 = vpop.f32.mrb[0].mxu0
  %249 = vmatprep.mubr.f32.mxu0 %v112
  %250 = vmatmul.mubr.f32.gmra.mrb[0].mxu0 %v40
  %v251 = vpop.f32.mrb[0].mxu0
  %v252 = vadd.f32 %v69, %v251
  %v253 = vpop.f32.mrb[0].mxu0
  %254 = vmatprep.mubr.f32.mxu0 %v115
  %255 = vmatmul.mubr.f32.gmra.mrb[0].mxu0 %v42
  %v256 = vpop.f32.mrb[0].mxu0
  %v257 = vadd.f32 %v69, %v256
  %v258 = vpop.f32.mrb[0].mxu0
  %259 = vmatprep.mubr.f32.mxu0 %v118
  %260 = vmatmul.mubr.f32.gmra.mrb[0].mxu0 %v44
  %v261 = vpop.f32.mrb[0].mxu0
  %v262 = vadd.f32 %v69, %v261
  %v263 = vpop.f32.mrb[0].mxu0
  %264 = vdwg.mxu0
  %vm265 = vcmask 261120
  %v266 = vsel %vm265, %v187, 0.0
  %v267 = vsel %vm265, %v192, 0.0
  %v268 = vadd.f32 %v266, %v267
  %v269 = vsel %vm265, %v197, 0.0
  %v270 = vadd.f32 %v268, %v269
  %v271 = vsel %vm265, %v202, 0.0
  %v272 = vadd.f32 %v270, %v271
  %v273 = vsel %vm265, %v207, 0.0
  %v274 = vadd.f32 %v272, %v273
  %v275 = vsel %vm265, %v212, 0.0
  %v276 = vadd.f32 %v274, %v275
  %v277 = vsel %vm265, %v217, 0.0
  %v278 = vadd.f32 %v276, %v277
  %v279 = vsel %vm265, %v222, 0.0
  %v280 = vadd.f32 %v278, %v279
  %v281 = vsel %vm265, %v227, 0.0
  %v282 = vadd.f32 %v280, %v281
  %v283 = vsel %vm265, %v232, 0.0
  %v284 = vadd.f32 %v282, %v283
  %v285 = vsel %vm265, %v237, 0.0
  %v286 = vadd.f32 %v284, %v285
  %v287 = vsel %vm265, %v242, 0.0
  %v288 = vadd.f32 %v286, %v287
  %v289 = vsel %vm265, %v247, 0.0
  %v290 = vadd.f32 %v288, %v289
  %v291 = vsel %vm265, %v252, 0.0
  %v292 = vadd.f32 %v290, %v291
  %v293 = vsel %vm265, %v257, 0.0
  %v294 = vadd.f32 %v292, %v293
  %v295 = vsel %vm265, %v262, 0.0
  %v296 = vadd.f32 %v294, %v295
  %v297 = vrot.slane %v296, 4
  %v298 = vadd.f32 %v296, %v297
  %v299 = vrot.slane %v298, 2
  %v300 = vadd.f32 %v298, %v299
  %v301 = vrot.slane %v300, 1
  %v302 = vadd.f32 %v300, %v301
  %v303 = vrcp.pop 128.0
  %v304 = vmul.f32 %v302, %v303
  %v305 = vsub.f32 %v187, %v304
  %v306 = vsub.f32 %v192, %v304
  %v307 = vsub.f32 %v197, %v304
  %v308 = vsub.f32 %v202, %v304
  %v309 = vsub.f32 %v207, %v304
  %v310 = vsub.f32 %v212, %v304
  %v311 = vsub.f32 %v217, %v304
  %v312 = vsub.f32 %v222, %v304
  %v313 = vsub.f32 %v227, %v304
  %v314 = vsub.f32 %v232, %v304
  %v315 = vsub.f32 %v237, %v304
  %v316 = vsub.f32 %v242, %v304
  %v317 = vsub.f32 %v247, %v304
  %v318 = vsub.f32 %v252, %v304
  %v319 = vsub.f32 %v257, %v304
  %v320 = vsub.f32 %v262, %v304
  %v321 = vmul.f32 %v305, %v305
  %v322 = vmul.f32 %v306, %v306
  %v323 = vmul.f32 %v307, %v307
  %v324 = vmul.f32 %v308, %v308
  %v325 = vmul.f32 %v309, %v309
  %v326 = vmul.f32 %v310, %v310
  %v327 = vmul.f32 %v311, %v311
  %v328 = vmul.f32 %v312, %v312
  %v329 = vmul.f32 %v313, %v313
  %v330 = vmul.f32 %v314, %v314
  %v331 = vmul.f32 %v315, %v315
  %v332 = vmul.f32 %v316, %v316
  %v333 = vmul.f32 %v317, %v317
  %v334 = vmul.f32 %v318, %v318
  %v335 = vmul.f32 %v319, %v319
  %v336 = vmul.f32 %v320, %v320
  %v337 = vsel %vm265, %v321, 0.0
  %v338 = vsel %vm265, %v322, 0.0
  %v339 = vadd.f32 %v337, %v338
  %v340 = vsel %vm265, %v323, 0.0
  %v341 = vadd.f32 %v339, %v340
  %v342 = vsel %vm265, %v324, 0.0
  %v343 = vadd.f32 %v341, %v342
  %v344 = vsel %vm265, %v325, 0.0
  %v345 = vadd.f32 %v343, %v344
  %v346 = vsel %vm265, %v326, 0.0
  %v347 = vadd.f32 %v345, %v346
  %v348 = vsel %vm265, %v327, 0.0
  %v349 = vadd.f32 %v347, %v348
  %v350 = vsel %vm265, %v328, 0.0
  %v351 = vadd.f32 %v349, %v350
  %v352 = vsel %vm265, %v329, 0.0
  %v353 = vadd.f32 %v351, %v352
  %v354 = vsel %vm265, %v330, 0.0
  %v355 = vadd.f32 %v353, %v354
  %v356 = vsel %vm265, %v331, 0.0
  %v357 = vadd.f32 %v355, %v356
  %v358 = vsel %vm265, %v332, 0.0
  %v359 = vadd.f32 %v357, %v358
  %v360 = vsel %vm265, %v333, 0.0
  %v361 = vadd.f32 %v359, %v360
  %v362 = vsel %vm265, %v334, 0.0
  %v363 = vadd.f32 %v361, %v362
  %v364 = vsel %vm265, %v335, 0.0
  %v365 = vadd.f32 %v363, %v364
  %v366 = vsel %vm265, %v336, 0.0
  %v367 = vadd.f32 %v365, %v366
  %v368 = vrot.slane %v367, 4
  %v369 = vadd.f32 %v367, %v368
  %v370 = vrot.slane %v369, 2
  %v371 = vadd.f32 %v369, %v370
  %v372 = vrot.slane %v371, 1
  %v373 = vadd.f32 %v371, %v372
  %v374 = vmul.f32 %v373, %v303
  %v375 = vadd.f32 %v374, 1e-05
  %v376 = vrsqrt.pop %v375
  %v377 = vmul.f32 %v305, %v376
  %v378 = vmul.f32 %v306, %v376
  %v379 = vmul.f32 %v307, %v376
  %v380 = vmul.f32 %v308, %v376
  %v381 = vmul.f32 %v309, %v376
  %v382 = vmul.f32 %v310, %v376
  %v383 = vmul.f32 %v311, %v376
  %v384 = vmul.f32 %v312, %v376
  %v385 = vmul.f32 %v313, %v376
  %v386 = vmul.f32 %v314, %v376
  %v387 = vmul.f32 %v315, %v376
  %v388 = vmul.f32 %v316, %v376
  %v389 = vmul.f32 %v317, %v376
  %v390 = vmul.f32 %v318, %v376
  %v391 = vmul.f32 %v319, %v376
  %v392 = vmul.f32 %v320, %v376
  %v393 = vmax.f32 %v377, 0.0
  %v394 = vmax.f32 %v378, 0.0
  %v395 = vmax.f32 %v379, 0.0
  %v396 = vmax.f32 %v380, 0.0
  %v397 = vmax.f32 %v381, 0.0
  %v398 = vmax.f32 %v382, 0.0
  %v399 = vmax.f32 %v383, 0.0
  %v400 = vmax.f32 %v384, 0.0
  %v401 = vmax.f32 %v385, 0.0
  %v402 = vmax.f32 %v386, 0.0
  %v403 = vmax.f32 %v387, 0.0
  %v404 = vmax.f32 %v388, 0.0
  %v405 = vmax.f32 %v389, 0.0
  %v406 = vmax.f32 %v390, 0.0
  %v407 = vmax.f32 %v391, 0.0
  %v408 = vmax.f32 %v392, 0.0
  %409 = vst.msk [vmem:[%s3] sm:$0xff] %vm265, %v393
  %410 = vst.msk [vmem:[%s3 + $0x8] sm:$0xff] %vm265, %v394
  %411 = vst.msk [vmem:[%s3 + $0x10] sm:$0xff] %vm265, %v395
  %412 = vst.msk [vmem:[%s3 + $0x18] sm:$0xff] %vm265, %v396
  %413 = vst.msk [vmem:[%s3 + $0x20] sm:$0xff] %vm265, %v397
  %414 = vst.msk [vmem:[%s3 + $0x28] sm:$0xff] %vm265, %v398
  %415 = vst.msk [vmem:[%s3 + $0x30] sm:$0xff] %vm265, %v399
  %416 = vst.msk [vmem:[%s3 + $0x38] sm:$0xff] %vm265, %v400
  %417 = vst.msk [vmem:[%s3 + $0x40] sm:$0xff] %vm265, %v401
  %418 = vst.msk [vmem:[%s3 + $0x48] sm:$0xff] %vm265, %v402
  %419 = vst.msk [vmem:[%s3 + $0x50] sm:$0xff] %vm265, %v403
  %420 = vst.msk [vmem:[%s3 + $0x58] sm:$0xff] %vm265, %v404
  %421 = vst.msk [vmem:[%s3 + $0x60] sm:$0xff] %vm265, %v405
  %422 = vst.msk [vmem:[%s3 + $0x68] sm:$0xff] %vm265, %v406
  %423 = vst.msk [vmem:[%s3 + $0x70] sm:$0xff] %vm265, %v407
  %424 = vst.msk [vmem:[%s3 + $0x78] sm:$0xff] %vm265, %v408
  // Predicated region
  $region14: #{net_forward.6} parent=0 // pred_check
    _
  $region15: #{net_forward.6} parent=0 // pred_check_branch
    %426 = sbr.rel (0) target = $region17
  $region16: #{net_forward.6} parent=0 // pred_region
    _
  $region17: #{net_forward.6} parent=0 // pred_fallthru
    _
  // Predicated region
  $region18: #{net_forward.6} parent=0 // pred_check
    _
  $region19: #{net_forward.6} parent=0 // pred_check_branch
    %428 = sbr.rel (0) target = $region21
  $region20: #{net_forward.6} parent=0 // pred_region
    _
  $region21: #{net_forward.6} parent=0 // pred_fallthru
    _

// kernel: net_forward.7
$region0: #{net_forward.7}
  #allocation0 [shape = 'u32[]', space=smem, size = 0x4, offset = 0x4, fixed_abs, tag = 'smem constant byte address 0x4 - core index']
  #allocation1 [shape = 'u32[144,128]{1,0:T(1,128)}', space=vmem, size = 0x12000, scoped, tag = 'internal scratch']
  %s0 = inlined_call_operand.vmem [shape: f32[32,288], index: 0, kind: input, shape index: {}]
  %s1 = inlined_call_operand.vmem [shape: f32[288,64], index: 1, kind: input, shape index: {}]
  %s2 = inlined_call_operand.vmem [shape: f32[1,64], index: 2, kind: input, shape index: {}]
  %s3 = inlined_call_operand.vmem [shape: f32[32,64], index: 3, kind: output, shape index: {}]
  %s4 = sld [smem:[#allocation0]]
  $region22: #{net_forward.7} parent=0
    _
  %s6 = ssub.s32 1, %s4
  %s7 = scalar_select 0, %s6, %s4
  // Predicated region
  $region2: #{net_forward.7} parent=0 // pred_check
    _
  $region3: #{net_forward.7} parent=0 // pred_check_branch
    %9 = sbr.rel (0) target = $region5
  $region4: #{net_forward.7} parent=0 // pred_region
    _
  $region5: #{net_forward.7} parent=0 // pred_fallthru
    _
  // Predicated region
  $region6: #{net_forward.7} parent=0 // pred_check
    _
  $region7: #{net_forward.7} parent=0 // pred_check_branch
    %11 = sbr.rel (0) target = $region9
  $region8: #{net_forward.7} parent=0 // pred_region
    _
  $region9: #{net_forward.7} parent=0 // pred_fallthru
    _
  // Predicated region
  $region10: #{net_forward.7} parent=0 // pred_check
    _
  $region11: #{net_forward.7} parent=0 // pred_check_branch
    %13 = sbr.rel (0) target = $region13
  $region12: #{net_forward.7} parent=0 // pred_region
    _
  $region13: #{net_forward.7} parent=0 // pred_fallthru
    _
  %v14 = vld [vmem:[%s0] sm:$0xff]
  %v15 = vld [vmem:[%s0 + $0x8] sm:$0xff]
  %v16 = vld [vmem:[%s0 + $0x10] sm:$0xff]
  %v17 = vld [vmem:[%s0 + $0x18] sm:$0xff]
  %v18 = vld [vmem:[%s0 + $0x20] sm:$0xff]
  %v19 = vld [vmem:[%s0 + $0x28] sm:$0xff]
  %v20 = vld [vmem:[%s0 + $0x30] sm:$0xff]
  %v21 = vld [vmem:[%s0 + $0x38] sm:$0xff]
  %v22 = vld [vmem:[%s0 + $0x40] sm:$0xff]
  %v23 = vld [vmem:[%s0 + $0x48] sm:$0xff]
  %v24 = vld [vmem:[%s0 + $0x50] sm:$0xff]
  %v25 = vld [vmem:[%s0 + $0x58] sm:$0xff]
  %v26 = vld [vmem:[%s1] sm:$0xff]
  %v27 = vld [vmem:[%s1 + $0x8] sm:$0xff]
  %v28 = vld [vmem:[%s1 + $0x10] sm:$0xff]
  %v29 = vld [vmem:[%s1 + $0x18] sm:$0xff]
  %v30 = vld [vmem:[%s1 + $0x20] sm:$0xff]
  %v31 = vld [vmem:[%s1 + $0x28] sm:$0xff]
  %v32 = vld [vmem:[%s1 + $0x30] sm:$0xff]
  %v33 = vld [vmem:[%s1 + $0x38] sm:$0xff]
  %v34 = vld [vmem:[%s1 + $0x40] sm:$0xff]
  %v35 = vld [vmem:[%s1 + $0x48] sm:$0xff]
  %v36 = vld [vmem:[%s1 + $0x50] sm:$0xff]
  %v37 = vld [vmem:[%s1 + $0x58] sm:$0xff]
  %v38 = vld [vmem:[%s1 + $0x60] sm:$0xff]
  %v39 = vld [vmem:[%s1 + $0x68] sm:$0xff]
  %v40 = vld [vmem:[%s1 + $0x70] sm:$0xff]
  %v41 = vld [vmem:[%s1 + $0x78] sm:$0xff]
  %v42 = vld [vmem:[%s1 + $0x80] sm:$0xff]
  %v43 = vld [vmem:[%s1 + $0x88] sm:$0xff]
  %v44 = vld [vmem:[%s1 + $0x90] sm:$0xff]
  %v45 = vld [vmem:[%s1 + $0x98] sm:$0xff]
  %v46 = vld [vmem:[%s1 + $0xa0] sm:$0xff]
  %v47 = vld [vmem:[%s1 + $0xa8] sm:$0xff]
  %v48 = vld [vmem:[%s1 + $0xb0] sm:$0xff]
  %v49 = vld [vmem:[%s1 + $0xb8] sm:$0xff]
  %v50 = vld [vmem:[%s1 + $0xc0] sm:$0xff]
  %v51 = vld [vmem:[%s1 + $0xc8] sm:$0xff]
  %v52 = vld [vmem:[%s1 + $0xd0] sm:$0xff]
  %v53 = vld [vmem:[%s1 + $0xd8] sm:$0xff]
  %v54 = vld [vmem:[%s1 + $0xe0] sm:$0xff]
  %v55 = vld [vmem:[%s1 + $0xe8] sm:$0xff]
  %v56 = vld [vmem:[%s1 + $0xf0] sm:$0xff]
  %v57 = vld [vmem:[%s1 + $0xf8] sm:$0xff]
  %v58 = vld [vmem:[%s1 + $0x100] sm:$0xff]
  %v59 = vld [vmem:[%s1 + $0x108] sm:$0xff]
  %v60 = vld [vmem:[%s1 + $0x110] sm:$0xff]
  %v61 = vld [vmem:[%s1 + $0x118] sm:$0xff]
  %v62 = vld [vmem:[%s2] sm:$0x1]
  %v64 = vlaneseq
  %v65 = vshrl.u32 %v64, 7
  %v66 = vsub.s32 0, %v65
  %v67 = vrot.slane %v62, %v66
  %vm69 = vcmask 261120
  %v71 = vsel %vm69, %v16, 0
  %v74 = vsel %vm69, %v19, 0
  %v77 = vsel %vm69, %v22, 0
  %v80 = vsel %vm69, %v25, 0
  %82 = vmatprep.subr.mxu0 0.0
  %83 = vmatpush1.msra.mxu0 %v26
  %84 = vmatprep.subr.mxu0 0.0
  %85 = vmatpush1.msra.mxu0 %v27
  %86 = vmatprep.subr.mxu0 0.0
  %87 = vmatpush1.msra.mxu0 %v28
  %88 = vmatprep.subr.mxu0 0.0
  %89 = vmatpush1.msra.mxu0 %v29
  %90 = vmatprep.subr.mxu0 0.0
  %91 = vmatpush1.msra.mxu0 %v30
  %92 = vmatprep.subr.mxu0 0.0
  %93 = vmatpush1.msra.mxu0 %v31
  %94 = vmatprep.subr.mxu0 0.0
  %95 = vmatpush1.msra.mxu0 %v32
  %96 = vmatprep.subr.mxu0 0.0
  %97 = vmatpush1.msra.mxu0 %v33
  %98 = vmatprep.subr.mxu0 0.0
  %99 = vmatpush1.msra.mxu0 %v34
  %100 = vmatprep.subr.mxu0 0.0
  %101 = vmatpush1.msra.mxu0 %v35
  %102 = vmatprep.subr.mxu0 0.0
  %103 = vmatpush1.msra.mxu0 %v36
  %104 = vmatprep.subr.mxu0 0.0
  %105 = vmatpush1.msra.mxu0 %v37
  %106 = vmatprep.subr.mxu0 0.0
  %107 = vmatpush1.msra.mxu0 %v38
  %108 = vmatprep.subr.mxu0 0.0
  %109 = vmatpush1.msra.mxu0 %v39
  %110 = vmatprep.subr.mxu0 0.0
  %111 = vmatpush1.msra.mxu0 %v40
  %112 = vmatprep.subr.mxu0 0.0
  %113 = vmatpush1.msra.mxu0 %v41
  %114 = vmatprep.subr.mxu0 0.0
  %115 = vmatpush1.msra.mxu0 %v42
  %116 = vmatprep.subr.mxu0 0.0
  %117 = vmatpush1.msra.mxu0 %v43
  %118 = vmatprep.subr.mxu0 0.0
  %119 = vmatpush1.msra.mxu0 %v44
  %120 = vmatprep.subr.mxu0 0.0
  %121 = vmatpush1.msra.mxu0 %v45
  %122 = vmatprep.subr.mxu0 0.0
  %123 = vmatpush1.msra.mxu0 %v46
  %124 = vmatprep.subr.mxu0 0.0
  %125 = vmatpush1.msra.mxu0 %v47
  %126 = vmatprep.subr.mxu0 0.0
  %127 = vmatpush1.msra.mxu0 %v48
  %128 = vmatprep.subr.mxu0 0.0
  %129 = vmatpush1.msra.mxu0 %v49
  %130 = vmatprep.subr.mxu0 0.0
  %131 = vmatpush1.msra.mxu0 %v50
  %132 = vmatprep.subr.mxu0 0.0
  %133 = vmatpush1.msra.mxu0 %v51
  %134 = vmatprep.subr.mxu0 0.0
  %135 = vmatpush1.msra.mxu0 %v52
  %136 = vmatprep.subr.mxu0 0.0
  %137 = vmatpush1.msra.mxu0 %v53
  %138 = vmatprep.subr.mxu0 0.0
  %139 = vmatpush1.msra.mxu0 %v54
  %140 = vmatprep.subr.mxu0 0.0
  %141 = vmatpush1.msra.mxu0 %v55
  %142 = vmatprep.subr.mxu0 0.0
  %143 = vmatpush1.msra.mxu0 %v56
  %144 = vmatprep.subr.mxu0 0.0
  %145 = vmatpush1.msra.mxu0 %v57
  %146 = vmatprep.mubr.f32.mxu0 %v15
  %147 = vmatmul.mubr.f32.gmra.mrb[0].mxu0 %v14
  %v148 = vpop.f32.mrb[0].mxu0
  %v149 = vadd.f32 %v67, %v148
  %v150 = vpop.f32.mrb[0].mxu0
  %151 = vmatprep.mubr.f32.mxu0 %v18
  %152 = vmatmul.mubr.f32.gmra.mrb[0].mxu0 %v17
  %v153 = vpop.f32.mrb[0].mxu0
  %v154 = vadd.f32 %v67, %v153
  %v155 = vpop.f32.mrb[0].mxu0
  %156 = vmatprep.mubr.f32.mxu0 %v21
  %157 = vmatmul.mubr.f32.gmra.mrb[0].mxu0 %v20
  %v158 = vpop.f32.mrb[0].mxu0
  %v159 = vadd.f32 %v67, %v158
  %v160 = vpop.f32.mrb[0].mxu0
  %161 = vmatprep.mubr.f32.mxu0 %v24
  %162 = vmatmul.mubr.f32.gmra.mrb[0].mxu0 %v23
  %v163 = vpop.f32.mrb[0].mxu0
  %v164 = vadd.f32 %v67, %v163
  %v165 = vpop.f32.mrb[0].mxu0
  %166 = vdwg.mxu0
  %167 = vmatprep.subr.mxu0 0.0
  %168 = vmatpush1.msra.mxu0 %v58
  %169 = vmatprep.subr.mxu0 0.0
  %170 = vmatpush1.msra.mxu0 %v59
  %171 = vmatprep.subr.mxu0 0.0
  %172 = vmatpush1.msra.mxu0 %v60
  %173 = vmatprep.subr.mxu0 0.0
  %174 = vmatpush1.msra.mxu0 %v61
  %175 = vmatprep.subr.mxu0 0.0
  %176 = vmatpush1.msra.mxu0 0.0
  %177 = vmatprep.subr.mxu0 0.0
  %178 = vmatpush1.msra.mxu0 0.0
  %179 = vmatprep.subr.mxu0 0.0
  %180 = vmatpush1.msra.mxu0 0.0
  %181 = vmatprep.subr.mxu0 0.0
  %182 = vmatpush1.msra.mxu0 0.0
  %183 = vmatprep.subr.mxu0 0.0
  %184 = vmatpush1.msra.mxu0 0.0
  %185 = vmatprep.subr.mxu0 0.0
  %186 = vmatpush1.msra.mxu0 0.0
  %187 = vmatprep.subr.mxu0 0.0
  %188 = vmatpush1.msra.mxu0 0.0
  %189 = vmatprep.subr.mxu0 0.0
  %190 = vmatpush1.msra.mxu0 0.0
  %191 = vmatprep.subr.mxu0 0.0
  %192 = vmatpush1.msra.mxu0 0.0
  %193 = vmatprep.subr.mxu0 0.0
  %194 = vmatpush1.msra.mxu0 0.0
  %195 = vmatprep.subr.mxu0 0.0
  %196 = vmatpush1.msra.mxu0 0.0
  %197 = vmatprep.subr.mxu0 0.0
  %198 = vmatpush1.msra.mxu0 0.0
  %199 = vmatprep.subr.mxu0 0.0
  %200 = vmatpush1.msra.mxu0 0.0
  %201 = vmatprep.subr.mxu0 0.0
  %202 = vmatpush1.msra.mxu0 0.0
  %203 = vmatprep.subr.mxu0 0.0
  %204 = vmatpush1.msra.mxu0 0.0
  %205 = vmatprep.subr.mxu0 0.0
  %206 = vmatpush1.msra.mxu0 0.0
  %207 = vmatprep.subr.mxu0 0.0
  %208 = vmatpush1.msra.mxu0 0.0
  %209 = vmatprep.subr.mxu0 0.0
  %210 = vmatpush1.msra.mxu0 0.0
  %211 = vmatprep.subr.mxu0 0.0
  %212 = vmatpush1.msra.mxu0 0.0
  %213 = vmatprep.subr.mxu0 0.0
  %214 = vmatpush1.msra.mxu0 0.0
  %215 = vmatprep.subr.mxu0 0.0
  %216 = vmatpush1.msra.mxu0 0.0
  %217 = vmatprep.subr.mxu0 0.0
  %218 = vmatpush1.msra.mxu0 0.0
  %219 = vmatprep.subr.mxu0 0.0
  %220 = vmatpush1.msra.mxu0 0.0
  %221 = vmatprep.subr.mxu0 0.0
  %222 = vmatpush1.msra.mxu0 0.0
  %223 = vmatprep.subr.mxu0 0.0
  %224 = vmatpush1.msra.mxu0 0.0
  %225 = vmatprep.subr.mxu0 0.0
  %226 = vmatpush1.msra.mxu0 0.0
  %227 = vmatprep.subr.mxu0 0.0
  %228 = vmatpush1.msra.mxu0 0.0
  %229 = vmatprep.subr.mxu0 0.0
  %230 = vmatpush1.msra.mxu0 0.0
  %231 = vmatprep.mubr.f32.mxu0 0.0
  %232 = vmatmul.mubr.f32.gmra.mrb[0].mxu0 %v71
  %v233 = vpop.f32.mrb[0].mxu0
  %v234 = vadd.f32 %v149, %v233
  %v235 = vpop.f32.mrb[0].mxu0
  %236 = vmatprep.mubr.f32.mxu0 0.0
  %237 = vmatmul.mubr.f32.gmra.mrb[0].mxu0 %v74
  %v238 = vpop.f32.mrb[0].mxu0
  %v239 = vadd.f32 %v154, %v238
  %v240 = vpop.f32.mrb[0].mxu0
  %241 = vmatprep.mubr.f32.mxu0 0.0
  %242 = vmatmul.mubr.f32.gmra.mrb[0].mxu0 %v77
  %v243 = vpop.f32.mrb[0].mxu0
  %v244 = vadd.f32 %v159, %v243
  %v245 = vpop.f32.mrb[0].mxu0
  %246 = vmatprep.mubr.f32.mxu0 0.0
  %247 = vmatmul.mubr.f32.gmra.mrb[0].mxu0 %v80
  %v248 = vpop.f32.mrb[0].mxu0
  %v249 = vadd.f32 %v164, %v248
  %v250 = vpop.f32.mrb[0].mxu0
  %251 = vdwg.mxu0
  %vm252 = vcmask 523264
  %v253 = vsel %vm252, %v234, 0.0
  %v254 = vsel %vm252, %v239, 0.0
  %v255 = vadd.f32 %v253, %v254
  %v256 = vsel %vm252, %v244, 0.0
  %v257 = vadd.f32 %v255, %v256
  %v258 = vsel %vm252, %v249, 0.0
  %v259 = vadd.f32 %v257, %v258
  %v260 = vrot.slane %v259, 4
  %v261 = vadd.f32 %v259, %v260
  %v262 = vrot.slane %v261, 2
  %v263 = vadd.f32 %v261, %v262
  %v264 = vrot.slane %v263, 1
  %v265 = vadd.f32 %v263, %v264
  %v266 = vrcp.pop 32.0
  %v267 = vmul.f32 %v265, %v266
  %v268 = vsub.f32 %v234, %v267
  %v269 = vsub.f32 %v239, %v267
  %v270 = vsub.f32 %v244, %v267
  %v271 = vsub.f32 %v249, %v267
  %v272 = vmul.f32 %v268, %v268
  %v273 = vmul.f32 %v269, %v269
  %v274 = vmul.f32 %v270, %v270
  %v275 = vmul.f32 %v271, %v271
  %v276 = vsel %vm252, %v272, 0.0
  %v277 = vsel %vm252, %v273, 0.0
  %v278 = vadd.f32 %v276, %v277
  %v279 = vsel %vm252, %v274, 0.0
  %v280 = vadd.f32 %v278, %v279
  %v281 = vsel %vm252, %v275, 0.0
  %v282 = vadd.f32 %v280, %v281
  %v283 = vrot.slane %v282, 4
  %v284 = vadd.f32 %v282, %v283
  %v285 = vrot.slane %v284, 2
  %v286 = vadd.f32 %v284, %v285
  %v287 = vrot.slane %v286, 1
  %v288 = vadd.f32 %v286, %v287
  %v289 = vmul.f32 %v288, %v266
  %v290 = vadd.f32 %v289, 1e-05
  %v291 = vrsqrt.pop %v290
  %v292 = vmul.f32 %v268, %v291
  %v293 = vmul.f32 %v269, %v291
  %v294 = vmul.f32 %v270, %v291
  %v295 = vmul.f32 %v271, %v291
  %v296 = vmax.f32 %v292, 0.0
  %v297 = vmax.f32 %v293, 0.0
  %v298 = vmax.f32 %v294, 0.0
  %v299 = vmax.f32 %v295, 0.0
  %300 = vst.msk [vmem:[%s3] sm:$0xff] %vm252, %v296
  %301 = vst.msk [vmem:[%s3 + $0x8] sm:$0xff] %vm252, %v297
  %302 = vst.msk [vmem:[%s3 + $0x10] sm:$0xff] %vm252, %v298
  %303 = vst.msk [vmem:[%s3 + $0x18] sm:$0xff] %vm252, %v299
  // Predicated region
  $region14: #{net_forward.7} parent=0 // pred_check
    _
  $region15: #{net_forward.7} parent=0 // pred_check_branch
    %305 = sbr.rel (0) target = $region17
  $region16: #{net_forward.7} parent=0 // pred_region
    _
  $region17: #{net_forward.7} parent=0 // pred_fallthru
    _
  // Predicated region
  $region18: #{net_forward.7} parent=0 // pred_check
    _
  $region19: #{net_forward.7} parent=0 // pred_check_branch
    %307 = sbr.rel (0) target = $region21
  $region20: #{net_forward.7} parent=0 // pred_region
    _
  $region21: #{net_forward.7} parent=0 // pred_fallthru
    _

// kernel: net_forward.8
$region0: #{net_forward.8}
  #allocation0 [shape = 'u32[]', space=smem, size = 0x4, offset = 0x4, fixed_abs, tag = 'smem constant byte address 0x4 - core index']
  #allocation1 [shape = 'u32[144,128]{1,0:T(1,128)}', space=vmem, size = 0x12000, scoped, tag = 'internal scratch']
  %s0 = inlined_call_operand.vmem [shape: f32[8,576], index: 0, kind: input, shape index: {}]
  %s1 = inlined_call_operand.vmem [shape: f32[576,128], index: 1, kind: input, shape index: {}]
  %s2 = inlined_call_operand.vmem [shape: f32[1,128], index: 2, kind: input, shape index: {}]
  %s3 = inlined_call_operand.vmem [shape: f32[8,128], index: 3, kind: output, shape index: {}]
  %s4 = sld [smem:[#allocation0]]
  $region22: #{net_forward.8} parent=0
    _
  %s6 = ssub.s32 1, %s4
  %s7 = scalar_select 0, %s6, %s4
  // Predicated region
  $region2: #{net_forward.8} parent=0 // pred_check
    _
  $region3: #{net_forward.8} parent=0 // pred_check_branch
    %9 = sbr.rel (0) target = $region5
  $region4: #{net_forward.8} parent=0 // pred_region
    _
  $region5: #{net_forward.8} parent=0 // pred_fallthru
    _
  // Predicated region
  $region6: #{net_forward.8} parent=0 // pred_check
    _
  $region7: #{net_forward.8} parent=0 // pred_check_branch
    %11 = sbr.rel (0) target = $region9
  $region8: #{net_forward.8} parent=0 // pred_region
    _
  $region9: #{net_forward.8} parent=0 // pred_fallthru
    _
  // Predicated region
  $region10: #{net_forward.8} parent=0 // pred_check
    _
  $region11: #{net_forward.8} parent=0 // pred_check_branch
    %13 = sbr.rel (0) target = $region13
  $region12: #{net_forward.8} parent=0 // pred_region
    _
  $region13: #{net_forward.8} parent=0 // pred_fallthru
    _
  %v14 = vld [vmem:[%s0] sm:$0xff]
  %v15 = vld [vmem:[%s0 + $0x8] sm:$0xff]
  %v16 = vld [vmem:[%s0 + $0x10] sm:$0xff]
  %v17 = vld [vmem:[%s0 + $0x18] sm:$0xff]
  %v18 = vld [vmem:[%s0 + $0x20] sm:$0xff]
  %v19 = vld [vmem:[%s1] sm:$0xff]
  %v20 = vld [vmem:[%s1 + $0x8] sm:$0xff]
  %v21 = vld [vmem:[%s1 + $0x10] sm:$0xff]
  %v22 = vld [vmem:[%s1 + $0x18] sm:$0xff]
  %v23 = vld [vmem:[%s1 + $0x20] sm:$0xff]
  %v24 = vld [vmem:[%s1 + $0x28] sm:$0xff]
  %v25 = vld [vmem:[%s1 + $0x30] sm:$0xff]
  %v26 = vld [vmem:[%s1 + $0x38] sm:$0xff]
  %v27 = vld [vmem:[%s1 + $0x40] sm:$0xff]
  %v28 = vld [vmem:[%s1 + $0x48] sm:$0xff]
  %v29 = vld [vmem:[%s1 + $0x50] sm:$0xff]
  %v30 = vld [vmem:[%s1 + $0x58] sm:$0xff]
  %v31 = vld [vmem:[%s1 + $0x60] sm:$0xff]
  %v32 = vld [vmem:[%s1 + $0x68] sm:$0xff]
  %v33 = vld [vmem:[%s1 + $0x70] sm:$0xff]
  %v34 = vld [vmem:[%s1 + $0x78] sm:$0xff]
  %v35 = vld [vmem:[%s1 + $0x80] sm:$0xff]
  %v36 = vld [vmem:[%s1 + $0x88] sm:$0xff]
  %v37 = vld [vmem:[%s1 + $0x90] sm:$0xff]
  %v38 = vld [vmem:[%s1 + $0x98] sm:$0xff]
  %v39 = vld [vmem:[%s1 + $0xa0] sm:$0xff]
  %v40 = vld [vmem:[%s1 + $0xa8] sm:$0xff]
  %v41 = vld [vmem:[%s1 + $0xb0] sm:$0xff]
  %v42 = vld [vmem:[%s1 + $0xb8] sm:$0xff]
  %v43 = vld [vmem:[%s1 + $0xc0] sm:$0xff]
  %v44 = vld [vmem:[%s1 + $0xc8] sm:$0xff]
  %v45 = vld [vmem:[%s1 + $0xd0] sm:$0xff]
  %v46 = vld [vmem:[%s1 + $0xd8] sm:$0xff]
  %v47 = vld [vmem:[%s1 + $0xe0] sm:$0xff]
  %v48 = vld [vmem:[%s1 + $0xe8] sm:$0xff]
  %v49 = vld [vmem:[%s1 + $0xf0] sm:$0xff]
  %v50 = vld [vmem:[%s1 + $0xf8] sm:$0xff]
  %v51 = vld [vmem:[%s1 + $0x100] sm:$0xff]
  %v52 = vld [vmem:[%s1 + $0x108] sm:$0xff]
  %v53 = vld [vmem:[%s1 + $0x110] sm:$0xff]
  %v54 = vld [vmem:[%s1 + $0x118] sm:$0xff]
  %v55 = vld [vmem:[%s1 + $0x120] sm:$0xff]
  %v56 = vld [vmem:[%s1 + $0x128] sm:$0xff]
  %v57 = vld [vmem:[%s1 + $0x130] sm:$0xff]
  %v58 = vld [vmem:[%s1 + $0x138] sm:$0xff]
  %v59 = vld [vmem:[%s1 + $0x140] sm:$0xff]
  %v60 = vld [vmem:[%s1 + $0x148] sm:$0xff]
  %v61 = vld [vmem:[%s1 + $0x150] sm:$0xff]
  %v62 = vld [vmem:[%s1 + $0x158] sm:$0xff]
  %v63 = vld [vmem:[%s1 + $0x160] sm:$0xff]
  %v64 = vld [vmem:[%s1 + $0x168] sm:$0xff]
  %v65 = vld [vmem:[%s1 + $0x170] sm:$0xff]
  %v66 = vld [vmem:[%s1 + $0x178] sm:$0xff]
  %v67 = vld [vmem:[%s1 + $0x180] sm:$0xff]
  %v68 = vld [vmem:[%s1 + $0x188] sm:$0xff]
  %v69 = vld [vmem:[%s1 + $0x190] sm:$0xff]
  %v70 = vld [vmem:[%s1 + $0x198] sm:$0xff]
  %v71 = vld [vmem:[%s1 + $0x1a0] sm:$0xff]
  %v72 = vld [vmem:[%s1 + $0x1a8] sm:$0xff]
  %v73 = vld [vmem:[%s1 + $0x1b0] sm:$0xff]
  %v74 = vld [vmem:[%s1 + $0x1b8] sm:$0xff]
  %v75 = vld [vmem:[%s1 + $0x1c0] sm:$0xff]
  %v76 = vld [vmem:[%s1 + $0x1c8] sm:$0xff]
  %v77 = vld [vmem:[%s1 + $0x1d0] sm:$0xff]
  %v78 = vld [vmem:[%s1 + $0x1d8] sm:$0xff]
  %v79 = vld [vmem:[%s1 + $0x1e0] sm:$0xff]
  %v80 = vld [vmem:[%s1 + $0x1e8] sm:$0xff]
  %v81 = vld [vmem:[%s1 + $0x1f0] sm:$0xff]
  %v82 = vld [vmem:[%s1 + $0x1f8] sm:$0xff]
  %v83 = vld [vmem:[%s1 + $0x200] sm:$0xff]
  %v84 = vld [vmem:[%s1 + $0x208] sm:$0xff]
  %v85 = vld [vmem:[%s1 + $0x210] sm:$0xff]
  %v86 = vld [vmem:[%s1 + $0x218] sm:$0xff]
  %v87 = vld [vmem:[%s1 + $0x220] sm:$0xff]
  %v88 = vld [vmem:[%s1 + $0x228] sm:$0xff]
  %v89 = vld [vmem:[%s1 + $0x230] sm:$0xff]
  %v90 = vld [vmem:[%s1 + $0x238] sm:$0xff]
  %v91 = vld [vmem:[%s2] sm:$0x1]
  %v93 = vlaneseq
  %v94 = vshrl.u32 %v93, 7
  %v95 = vsub.s32 0, %v94
  %v96 = vrot.slane %v91, %v95
  %vm98 = vcmask 523264
  %v100 = vsel %vm98, %v18, 0
  %102 = vmatprep.subr.mxu0 0.0
  %103 = vmatpush1.msra.mxu0 %v19
  %104 = vmatprep.subr.mxu0 0.0
  %105 = vmatpush1.msra.mxu0 %v20
  %106 = vmatprep.subr.mxu0 0.0
  %107 = vmatpush1.msra.mxu0 %v21
  %108 = vmatprep.subr.mxu0 0.0
  %109 = vmatpush1.msra.mxu0 %v22
  %110 = vmatprep.subr.mxu0 0.0
  %111 = vmatpush1.msra.mxu0 %v23
  %112 = vmatprep.subr.mxu0 0.0
  %113 = vmatpush1.msra.mxu0 %v24
  %114 = vmatprep.subr.mxu0 0.0
  %115 = vmatpush1.msra.mxu0 %v25
  %116 = vmatprep.subr.mxu0 0.0
  %117 = vmatpush1.msra.mxu0 %v26
  %118 = vmatprep.subr.mxu0 0.0
  %119 = vmatpush1.msra.mxu0 %v27
  %120 = vmatprep.subr.mxu0 0.0
  %121 = vmatpush1.msra.mxu0 %v28
  %122 = vmatprep.subr.mxu0 0.0
  %123 = vmatpush1.msra.mxu0 %v29
  %124 = vmatprep.subr.mxu0 0.0
  %125 = vmatpush1.msra.mxu0 %v30
  %126 = vmatprep.subr.mxu0 0.0
  %127 = vmatpush1.msra.mxu0 %v31
  %128 = vmatprep.subr.mxu0 0.0
  %129 = vmatpush1.msra.mxu0 %v32
  %130 = vmatprep.subr.mxu0 0.0
  %131 = vmatpush1.msra.mxu0 %v33
  %132 = vmatprep.subr.mxu0 0.0
  %133 = vmatpush1.msra.mxu0 %v34
  %134 = vmatprep.subr.mxu0 0.0
  %135 = vmatpush1.msra.mxu0 %v35
  %136 = vmatprep.subr.mxu0 0.0
  %137 = vmatpush1.msra.mxu0 %v36
  %138 = vmatprep.subr.mxu0 0.0
  %139 = vmatpush1.msra.mxu0 %v37
  %140 = vmatprep.subr.mxu0 0.0
  %141 = vmatpush1.msra.mxu0 %v38
  %142 = vmatprep.subr.mxu0 0.0
  %143 = vmatpush1.msra.mxu0 %v39
  %144 = vmatprep.subr.mxu0 0.0
  %145 = vmatpush1.msra.mxu0 %v40
  %146 = vmatprep.subr.mxu0 0.0
  %147 = vmatpush1.msra.mxu0 %v41
  %148 = vmatprep.subr.mxu0 0.0
  %149 = vmatpush1.msra.mxu0 %v42
  %150 = vmatprep.subr.mxu0 0.0
  %151 = vmatpush1.msra.mxu0 %v43
  %152 = vmatprep.subr.mxu0 0.0
  %153 = vmatpush1.msra.mxu0 %v44
  %154 = vmatprep.subr.mxu0 0.0
  %155 = vmatpush1.msra.mxu0 %v45
  %156 = vmatprep.subr.mxu0 0.0
  %157 = vmatpush1.msra.mxu0 %v46
  %158 = vmatprep.subr.mxu0 0.0
  %159 = vmatpush1.msra.mxu0 %v47
  %160 = vmatprep.subr.mxu0 0.0
  %161 = vmatpush1.msra.mxu0 %v48
  %162 = vmatprep.subr.mxu0 0.0
  %163 = vmatpush1.msra.mxu0 %v49
  %164 = vmatprep.subr.mxu0 0.0
  %165 = vmatpush1.msra.mxu0 %v50
  %166 = vmatprep.mubr.f32.mxu0 %v15
  %167 = vmatmul.mubr.f32.gmra.mrb[0].mxu0 %v14
  %v168 = vpop.f32.mrb[0].mxu0
  %v169 = vadd.f32 %v96, %v168
  %v170 = vpop.f32.mrb[0].mxu0
  %171 = vdwg.mxu0
  %172 = vmatprep.subr.mxu0 0.0
  %173 = vmatpush1.msra.mxu0 %v51
  %174 = vmatprep.subr.mxu0 0.0
  %175 = vmatpush1.msra.mxu0 %v52
  %176 = vmatprep.subr.mxu0 0.0
  %177 = vmatpush1.msra.mxu0 %v53
  %178 = vmatprep.subr.mxu0 0.0
  %179 = vmatpush1.msra.mxu0 %v54
  %180 = vmatprep.subr.mxu0 0.0
  %181 = vmatpush1.msra.mxu0 %v55
  %182 = vmatprep.subr.mxu0 0.0
  %183 = vmatpush1.msra.mxu0 %v56
  %184 = vmatprep.subr.mxu0 0.0
  %185 = vmatpush1.msra.mxu0 %v57
  %186 = vmatprep.subr.mxu0 0.0
  %187 = vmatpush1.msra.mxu0 %v58
  %188 = vmatprep.subr.mxu0 0.0
  %189 = vmatpush1.msra.mxu0 %v59
  %190 = vmatprep.subr.mxu0 0.0
  %191 = vmatpush1.msra.mxu0 %v60
  %192 = vmatprep.subr.mxu0 0.0
  %193 = vmatpush1.msra.mxu0 %v61
  %194 = vmatprep.subr.mxu0 0.0
  %195 = vmatpush1.msra.mxu0 %v62
  %196 = vmatprep.subr.mxu0 0.0
  %197 = vmatpush1.msra.mxu0 %v63
  %198 = vmatprep.subr.mxu0 0.0
  %199 = vmatpush1.msra.mxu0 %v64
  %200 = vmatprep.subr.mxu0 0.0
  %201 = vmatpush1.msra.mxu0 %v65
  %202 = vmatprep.subr.mxu0 0.0
  %203 = vmatpush1.msra.mxu0 %v66
  %204 = vmatprep.subr.mxu0 0.0
  %205 = vmatpush1.msra.mxu0 %v67
  %206 = vmatprep.subr.mxu0 0.0
  %207 = vmatpush1.msra.mxu0 %v68
  %208 = vmatprep.subr.mxu0 0.0
  %209 = vmatpush1.msra.mxu0 %v69
  %210 = vmatprep.subr.mxu0 0.0
  %211 = vmatpush1.msra.mxu0 %v70
  %212 = vmatprep.subr.mxu0 0.0
  %213 = vmatpush1.msra.mxu0 %v71
  %214 = vmatprep.subr.mxu0 0.0
  %215 = vmatpush1.msra.mxu0 %v72
  %216 = vmatprep.subr.mxu0 0.0
  %217 = vmatpush1.msra.mxu0 %v73
  %218 = vmatprep.subr.mxu0 0.0
  %219 = vmatpush1.msra.mxu0 %v74
  %220 = vmatprep.subr.mxu0 0.0
  %221 = vmatpush1.msra.mxu0 %v75
  %222 = vmatprep.subr.mxu0 0.0
  %223 = vmatpush1.msra.mxu0 %v76
  %224 = vmatprep.subr.mxu0 0.0
  %225 = vmatpush1.msra.mxu0 %v77
  %226 = vmatprep.subr.mxu0 0.0
  %227 = vmatpush1.msra.mxu0 %v78
  %228 = vmatprep.subr.mxu0 0.0
  %229 = vmatpush1.msra.mxu0 %v79
  %230 = vmatprep.subr.mxu0 0.0
  %231 = vmatpush1.msra.mxu0 %v80
  %232 = vmatprep.subr.mxu0 0.0
  %233 = vmatpush1.msra.mxu0 %v81
  %234 = vmatprep.subr.mxu0 0.0
  %235 = vmatpush1.msra.mxu0 %v82
  %236 = vmatprep.mubr.f32.mxu0 %v17
  %237 = vmatmul.mubr.f32.gmra.mrb[0].mxu0 %v16
  %v238 = vpop.f32.mrb[0].mxu0
  %v239 = vadd.f32 %v169, %v238
  %v240 = vpop.f32.mrb[0].mxu0
  %241 = vdwg.mxu0
  %242 = vmatprep.subr.mxu0 0.0
  %243 = vmatpush1.msra.mxu0 %v83
  %244 = vmatprep.subr.mxu0 0.0
  %245 = vmatpush1.msra.mxu0 %v84
  %246 = vmatprep.subr.mxu0 0.0
  %247 = vmatpush1.msra.mxu0 %v85
  %248 = vmatprep.subr.mxu0 0.0
  %249 = vmatpush1.msra.mxu0 %v86
  %250 = vmatprep.subr.mxu0 0.0
  %251 = vmatpush1.msra.mxu0 %v87
  %252 = vmatprep.subr.mxu0 0.0
  %253 = vmatpush1.msra.mxu0 %v88
  %254 = vmatprep.subr.mxu0 0.0
  %255 = vmatpush1.msra.mxu0 %v89
  %256 = vmatprep.subr.mxu0 0.0
  %257 = vmatpush1.msra.mxu0 %v90
  %258 = vmatprep.subr.mxu0 0.0
  %259 = vmatpush1.msra.mxu0 0.0
  %260 = vmatprep.subr.mxu0 0.0
  %261 = vmatpush1.msra.mxu0 0.0
  %262 = vmatprep.subr.mxu0 0.0
  %263 = vmatpush1.msra.mxu0 0.0
  %264 = vmatprep.subr.mxu0 0.0
  %265 = vmatpush1.msra.mxu0 0.0
  %266 = vmatprep.subr.mxu0 0.0
  %267 = vmatpush1.msra.mxu0 0.0
  %268 = vmatprep.subr.mxu0 0.0
  %269 = vmatpush1.msra.mxu0 0.0
  %270 = vmatprep.subr.mxu0 0.0
  %271 = vmatpush1.msra.mxu0 0.0
  %272 = vmatprep.subr.mxu0 0.0
  %273 = vmatpush1.msra.mxu0 0.0
  %274 = vmatprep.subr.mxu0 0.0
  %275 = vmatpush1.msra.mxu0 0.0
  %276 = vmatprep.subr.mxu0 0.0
  %277 = vmatpush1.msra.mxu0 0.0
  %278 = vmatprep.subr.mxu0 0.0
  %279 = vmatpush1.msra.mxu0 0.0
  %280 = vmatprep.subr.mxu0 0.0
  %281 = vmatpush1.msra.mxu0 0.0
  %282 = vmatprep.subr.mxu0 0.0
  %283 = vmatpush1.msra.mxu0 0.0
  %284 = vmatprep.subr.mxu0 0.0
  %285 = vmatpush1.msra.mxu0 0.0
  %286 = vmatprep.subr.mxu0 0.0
  %287 = vmatpush1.msra.mxu0 0.0
  %288 = vmatprep.subr.mxu0 0.0
  %289 = vmatpush1.msra.mxu0 0.0
  %290 = vmatprep.subr.mxu0 0.0
  %291 = vmatpush1.msra.mxu0 0.0
  %292 = vmatprep.subr.mxu0 0.0
  %293 = vmatpush1.msra.mxu0 0.0
  %294 = vmatprep.subr.mxu0 0.0
  %295 = vmatpush1.msra.mxu0 0.0
  %296 = vmatprep.subr.mxu0 0.0
  %297 = vmatpush1.msra.mxu0 0.0
  %298 = vmatprep.subr.mxu0 0.0
  %299 = vmatpush1.msra.mxu0 0.0
  %300 = vmatprep.subr.mxu0 0.0
  %301 = vmatpush1.msra.mxu0 0.0
  %302 = vmatprep.subr.mxu0 0.0
  %303 = vmatpush1.msra.mxu0 0.0
  %304 = vmatprep.subr.mxu0 0.0
  %305 = vmatpush1.msra.mxu0 0.0
  %306 = vmatprep.mubr.f32.mxu0 0.0
  %307 = vmatmul.mubr.f32.gmra.mrb[0].mxu0 %v100
  %v308 = vpop.f32.mrb[0].mxu0
  %v309 = vadd.f32 %v239, %v308
  %v310 = vpop.f32.mrb[0].mxu0
  %311 = vdwg.mxu0
  %312 = vst [vmem:[%s3] sm:$0xff] %v309
  // Predicated region
  $region14: #{net_forward.8} parent=0 // pred_check
    _
  $region15: #{net_forward.8} parent=0 // pred_check_branch
    %314 = sbr.rel (0) target = $region17
  $region16: #{net_forward.8} parent=0 // pred_region
    _
  $region17: #{net_forward.8} parent=0 // pred_fallthru
    _
  // Predicated region
  $region18: #{net_forward.8} parent=0 // pred_check
    _
  $region19: #{net_forward.8} parent=0 // pred_check_branch
    %316 = sbr.rel (0) target = $region21
  $region20: #{net_forward.8} parent=0 // pred_region
    _
  $region21: #{net_forward.8} parent=0 // pred_fallthru
    _

// kernel: net_forward.9
$region0: #{net_forward.9}
  #allocation0 [shape = 'u32[]', space=smem, size = 0x4, offset = 0x4, fixed_abs, tag = 'smem constant byte address 0x4 - core index']
  #allocation1 [shape = 'u32[144,128]{1,0:T(1,128)}', space=vmem, size = 0x12000, scoped, tag = 'internal scratch']
  %s0 = inlined_call_operand.vmem [shape: f32[2,8], index: 0, kind: input, shape index: {}]
  %s1 = inlined_call_operand.vmem [shape: f32[8,128], index: 1, kind: input, shape index: {}]
  %s2 = inlined_call_operand.vmem [shape: f32[128,10], index: 2, kind: input, shape index: {}]
  %s3 = inlined_call_operand.vmem [shape: f32[1,10], index: 3, kind: input, shape index: {}]
  %s4 = inlined_call_operand.hbm [shape: f32[2,10], index: 4, kind: output, shape index: {}]
  %s5 = sld [smem:[#allocation0]]
  $region26: #{net_forward.9} parent=0
    _
  %s7 = ssub.s32 1, %s5
  %s8 = scalar_select 0, %s7, %s5
  $region1: #{net_forward.9} parent=0
    #allocation2 [shape = 'u8[1024]{0}', space=vmem, size = 0x400, scoped, tag = 'output window, operand 0, single buffered']
    #allocation3 [shape = 's32[1]{0}', space=sflag, size = 0x4, scoped, tag = 'scoped memory for net_forward.9']
    %9 = vsyncpa [#allocation3], 0
    // Predicated region
    $region2: #{net_forward.9} parent=1 // pred_check
      _
    $region3: #{net_forward.9} parent=1 // pred_check_branch
      %11 = sbr.rel (0) target = $region5
    $region4: #{net_forward.9} parent=1 // pred_region
      _
    $region5: #{net_forward.9} parent=1 // pred_fallthru
      _
    // Predicated region
    $region6: #{net_forward.9} parent=1 // pred_check
      _
    $region7: #{net_forward.9} parent=1 // pred_check_branch
      %13 = sbr.rel (0) target = $region9
    $region8: #{net_forward.9} parent=1 // pred_region
      _
    $region9: #{net_forward.9} parent=1 // pred_fallthru
      _
    // Predicated region
    $region10: #{net_forward.9} parent=1 // pred_check
      _
    $region11: #{net_forward.9} parent=1 // pred_check_branch
      %15 = sbr.rel (0) target = $region13
    $region12: #{net_forward.9} parent=1 // pred_region
      _
    $region13: #{net_forward.9} parent=1 // pred_fallthru
      _
    // Predicated region
    $region14: #{net_forward.9} parent=1 // pred_check
      _
    $region15: #{net_forward.9} parent=1 // pred_check_branch
      %17 = sbr.rel (0) target = $region17
    $region16: #{net_forward.9} parent=1 // pred_region
      _
    $region17: #{net_forward.9} parent=1 // pred_fallthru
      _
    %v18 = vld [vmem:[%s0] sm:$0x3]
    %v19 = vld [vmem:[%s1] sm:$0xff]
    %vm20 = vcmask 64512
    %v22 = vsel %vm20, %v18, 0
    %24 = vmatprep.subr.mxu0 0.0
    %25 = vmatpush1.msra.mxu0 %v19
    %26 = vmatprep.subr.mxu0 0.0
    %27 = vmatpush1.msra.mxu0 0.0
    %28 = vmatprep.subr.mxu0 0.0
    %29 = vmatpush1.msra.mxu0 0.0
    %30 = vmatprep.subr.mxu0 0.0
    %31 = vmatpush1.msra.mxu0 0.0
    %32 = vmatprep.subr.mxu0 0.0
    %33 = vmatpush1.msra.mxu0 0.0
    %34 = vmatprep.subr.mxu0 0.0
    %35 = vmatpush1.msra.mxu0 0.0
    %36 = vmatprep.subr.mxu0 0.0
    %37 = vmatpush1.msra.mxu0 0.0
    %38 = vmatprep.subr.mxu0 0.0
    %39 = vmatpush1.msra.mxu0 0.0
    %40 = vmatprep.subr.mxu0 0.0
    %41 = vmatpush1.msra.mxu0 0.0
    %42 = vmatprep.subr.mxu0 0.0
    %43 = vmatpush1.msra.mxu0 0.0
    %44 = vmatprep.subr.mxu0 0.0
    %45 = vmatpush1.msra.mxu0 0.0
    %46 = vmatprep.subr.mxu0 0.0
    %47 = vmatpush1.msra.mxu0 0.0
    %48 = vmatprep.subr.mxu0 0.0
    %49 = vmatpush1.msra.mxu0 0.0
    %50 = vmatprep.subr.mxu0 0.0
    %51 = vmatpush1.msra.mxu0 0.0
    %52 = vmatprep.subr.mxu0 0.0
    %53 = vmatpush1.msra.mxu0 0.0
    %54 = vmatprep.subr.mxu0 0.0
    %55 = vmatpush1.msra.mxu0 0.0
    %56 = vmatprep.subr.mxu0 0.0
    %57 = vmatpush1.msra.mxu0 0.0
    %58 = vmatprep.subr.mxu0 0.0
    %59 = vmatpush1.msra.mxu0 0.0
    %60 = vmatprep.subr.mxu0 0.0
    %61 = vmatpush1.msra.mxu0 0.0
    %62 = vmatprep.subr.mxu0 0.0
    %63 = vmatpush1.msra.mxu0 0.0
    %64 = vmatprep.subr.mxu0 0.0
    %65 = vmatpush1.msra.mxu0 0.0
    %66 = vmatprep.subr.mxu0 0.0
    %67 = vmatpush1.msra.mxu0 0.0
    %68 = vmatprep.subr.mxu0 0.0
    %69 = vmatpush1.msra.mxu0 0.0
    %70 = vmatprep.subr.mxu0 0.0
    %71 = vmatpush1.msra.mxu0 0.0
    %72 = vmatprep.subr.mxu0 0.0
    %73 = vmatpush1.msra.mxu0 0.0
    %74 = vmatprep.subr.mxu0 0.0
    %75 = vmatpush1.msra.mxu0 0.0
    %76 = vmatprep.subr.mxu0 0.0
    %77 = vmatpush1.msra.mxu0 0.0
    %78 = vmatprep.subr.mxu0 0.0
    %79 = vmatpush1.msra.mxu0 0.0
    %80 = vmatprep.subr.mxu0 0.0
    %81 = vmatpush1.msra.mxu0 0.0
    %82 = vmatprep.subr.mxu0 0.0
    %83 = vmatpush1.msra.mxu0 0.0
    %84 = vmatprep.subr.mxu0 0.0
    %85 = vmatpush1.msra.mxu0 0.0
    %86 = vmatprep.subr.mxu0 0.0
    %87 = vmatpush1.msra.mxu0 0.0
    %88 = vmatprep.mubr.f32.mxu0 0.0
    %89 = vmatmul.mubr.f32.gmra.mrb[0].mxu0 %v22
    %v90 = vpop.f32.mrb[0].mxu0
    %v91 = vadd.f32 0.0, %v90
    %v92 = vpop.f32.mrb[0].mxu0
    %93 = vdwg.mxu0
    %v94 = vld [vmem:[%s2] sm:$0xff]
    %v95 = vld [vmem:[%s2 + $0x8] sm:$0xff]
    %v96 = vld [vmem:[%s2 + $0x10] sm:$0xff]
    %v97 = vld [vmem:[%s2 + $0x18] sm:$0xff]
    %v98 = vld [vmem:[%s2 + $0x20] sm:$0xff]
    %v99 = vld [vmem:[%s2 + $0x28] sm:$0xff]
    %v100 = vld [vmem:[%s2 + $0x30] sm:$0xff]
    %v101 = vld [vmem:[%s2 + $0x38] sm:$0xff]
    %v102 = vld [vmem:[%s2 + $0x40] sm:$0xff]
    %v103 = vld [vmem:[%s2 + $0x48] sm:$0xff]
    %v104 = vld [vmem:[%s2 + $0x50] sm:$0xff]
    %v105 = vld [vmem:[%s2 + $0x58] sm:$0xff]
    %v106 = vld [vmem:[%s2 + $0x60] sm:$0xff]
    %v107 = vld [vmem:[%s2 + $0x68] sm:$0xff]
    %v108 = vld [vmem:[%s2 + $0x70] sm:$0xff]
    %v109 = vld [vmem:[%s2 + $0x78] sm:$0xff]
    %v110 = vld [vmem:[%s3] sm:$0x1]
    %v112 = vlaneseq
    %v113 = vshrl.u32 %v112, 7
    %v114 = vsub.s32 0, %v113
    %v115 = vrot.slane %v110, %v114
    %117 = vmatprep.subr.mxu0 0.0
    %118 = vmatpush1.msra.mxu0 %v94
    %119 = vmatprep.subr.mxu0 0.0
    %120 = vmatpush1.msra.mxu0 %v95
    %121 = vmatprep.subr.mxu0 0.0
    %122 = vmatpush1.msra.mxu0 %v96
    %123 = vmatprep.subr.mxu0 0.0
    %124 = vmatpush1.msra.mxu0 %v97
    %125 = vmatprep.subr.mxu0 0.0
    %126 = vmatpush1.msra.mxu0 %v98
    %127 = vmatprep.subr.mxu0 0.0
    %128 = vmatpush1.msra.mxu0 %v99
    %129 = vmatprep.subr.mxu0 0.0
    %130 = vmatpush1.msra.mxu0 %v100
    %131 = vmatprep.subr.mxu0 0.0
    %132 = vmatpush1.msra.mxu0 %v101
    %133 = vmatprep.subr.mxu0 0.0
    %134 = vmatpush1.msra.mxu0 %v102
    %135 = vmatprep.subr.mxu0 0.0
    %136 = vmatpush1.msra.mxu0 %v103
    %137 = vmatprep.subr.mxu0 0.0
    %138 = vmatpush1.msra.mxu0 %v104
    %139 = vmatprep.subr.mxu0 0.0
    %140 = vmatpush1.msra.mxu0 %v105
    %141 = vmatprep.subr.mxu0 0.0
    %142 = vmatpush1.msra.mxu0 %v106
    %143 = vmatprep.subr.mxu0 0.0
    %144 = vmatpush1.msra.mxu0 %v107
    %145 = vmatprep.subr.mxu0 0.0
    %146 = vmatpush1.msra.mxu0 %v108
    %147 = vmatprep.subr.mxu0 0.0
    %148 = vmatpush1.msra.mxu0 %v109
    %149 = vmatprep.subr.mxu0 0.0
    %150 = vmatpush1.msra.mxu0 0.0
    %151 = vmatprep.subr.mxu0 0.0
    %152 = vmatpush1.msra.mxu0 0.0
    %153 = vmatprep.subr.mxu0 0.0
    %154 = vmatpush1.msra.mxu0 0.0
    %155 = vmatprep.subr.mxu0 0.0
    %156 = vmatpush1.msra.mxu0 0.0
    %157 = vmatprep.subr.mxu0 0.0
    %158 = vmatpush1.msra.mxu0 0.0
    %159 = vmatprep.subr.mxu0 0.0
    %160 = vmatpush1.msra.mxu0 0.0
    %161 = vmatprep.subr.mxu0 0.0
    %162 = vmatpush1.msra.mxu0 0.0
    %163 = vmatprep.subr.mxu0 0.0
    %164 = vmatpush1.msra.mxu0 0.0
    %165 = vmatprep.subr.mxu0 0.0
    %166 = vmatpush1.msra.mxu0 0.0
    %167 = vmatprep.subr.mxu0 0.0
    %168 = vmatpush1.msra.mxu0 0.0
    %169 = vmatprep.subr.mxu0 0.0
    %170 = vmatpush1.msra.mxu0 0.0
    %171 = vmatprep.subr.mxu0 0.0
    %172 = vmatpush1.msra.mxu0 0.0
    %173 = vmatprep.subr.mxu0 0.0
    %174 = vmatpush1.msra.mxu0 0.0
    %175 = vmatprep.subr.mxu0 0.0
    %176 = vmatpush1.msra.mxu0 0.0
    %177 = vmatprep.subr.mxu0 0.0
    %178 = vmatpush1.msra.mxu0 0.0
    %179 = vmatprep.subr.mxu0 0.0
    %180 = vmatpush1.msra.mxu0 0.0
    %181 = vmatprep.mubr.f32.mxu0 0.0
    %182 = vmatmul.mubr.f32.gmra.mrb[0].mxu0 %v91
    %v183 = vpop.f32.mrb[0].mxu0
    %v184 = vadd.f32 %v115, %v183
    %v185 = vpop.f32.mrb[0].mxu0
    %186 = vdwg.mxu0
    %vm187 = vcmask 74752
    %188 = vst.msk [vmem:[#allocation2] sm:$0x3] %vm187, %v184
    // Predicated region
    $region18: #{net_forward.9} parent=1 // pred_check
      _
    $region19: #{net_forward.9} parent=1 // pred_check_branch
      %190 = sbr.rel (0) target = $region21
    $region20: #{net_forward.9} parent=1 // pred_region
      %s192 = ssub.s32 32, 32
      %193 = vsyncadd [#allocation3], %s192
      %s195 = sshll.u32 [#allocation2], 4
      %s196 = int_to_ptr.vmem [resolvable:$true] %s195
      %198 = dma.vmem_to_hbm [thread:$0]  %s196, 32, %s4, [#allocation3]
    $region21: #{net_forward.9} parent=1 // pred_fallthru
      _
    // Predicated region
    $region22: #{net_forward.9} parent=1 // pred_check
      _
    $region23: #{net_forward.9} parent=1 // pred_check_branch
      %200 = sbr.rel (0) target = $region25
    $region24: #{net_forward.9} parent=1 // pred_region
      %201 = dma.done [#allocation3], 32
    $region25: #{net_forward.9} parent=1 // pred_fallthru
      _
    %202 = vsyncpa [#allocation3], 1

</llo_original>
